<compile_context>
chip_gen: v5e
topology: v5e:2x2
jax: 0.10.0
libtpu: 0.0.40
codegen_flags: <defaults>
</compile_context>

<pallas_src>
import jax
import jax.numpy as jnp
from jax.experimental import pallas as pl
from jax.experimental.pallas import tpu as pltpu

# ---------------- config (small, shape-consistent with a Mistral block) ----
BATCH = 2
SEQ = 8
HIDDEN = 32
N_HEADS = 4
HEAD_DIM = HIDDEN // N_HEADS
FFN = 64
N_LAYERS = 2
VOCAB = 128
LORA_R = 8
LORA_ALPHA = 16
LORA_SCALE = LORA_ALPHA / LORA_R
RMS_EPS = 1e-5
ATTN_SCALE = 1.0 / (HEAD_DIM ** 0.5)


# ---------------- in-kernel helpers -----------------------------------------
def _rms(x, w):
    # x: [S, D] f32, w: [1, D] f32
    var = jnp.mean(x * x, axis=-1, keepdims=True)
    return x * jax.lax.rsqrt(var + RMS_EPS) * w


def _mm(x, w):
    # cast the activation to the weight dtype (bf16 weights -> bf16 MXU inputs),
    # accumulate in f32 on the MXU.
    return jnp.dot(x.astype(w.dtype), w, preferred_element_type=jnp.float32)


# ---------------- the fused encoder kernel ----------------------------------
def _encoder_kernel(ids_ref, mask_ref, cosf_ref, sinf_ref, rot_ref, embed_ref,
                    fnorm_ref, anorm_ref, mnorm_ref, wqkv_ref, wo_ref,
                    wgu_ref, wdown_ref, out_ref, x_scr):
    layer = pl.program_id(1)
    last = pl.num_programs(1) - 1

    # ---- first layer step: token embedding as a one-hot MXU matmul ----
    @pl.when(layer == 0)
    def _():
        ids = ids_ref[0]                                              # [S, 1] i32
        iota = jax.lax.broadcasted_iota(jnp.int32, (SEQ, VOCAB), 1)
        onehot = (iota == ids).astype(jnp.float32)                    # [S, V]
        x_scr[...] = jnp.dot(onehot, embed_ref[...],
                             preferred_element_type=jnp.float32)      # [S, D]

    mask = mask_ref[0].astype(jnp.float32)       # [1, S]
    key_bias = (mask - 1.0) * 1e9                # additive key-side padding bias
    cosf = cosf_ref[...]                         # [S, D] (per-head tables tiled)
    sinf = sinf_ref[...]
    rot = rot_ref[...]                           # [D, D] rotate_half as a matrix

    x = x_scr[...]                               # [S, D] residual stream (f32)

    # ---------------- self-attention block (bidirectional, mntp) ----------------
    hn = _rms(x, anorm_ref[0])                   # [S, D]
    qkv = _mm(hn, wqkv_ref[0])                   # [S, 3D]  fused q/k/v projection
    q = qkv[:, 0:HIDDEN]
    k = qkv[:, HIDDEN:2 * HIDDEN]
    v = qkv[:, 2 * HIDDEN:3 * HIDDEN]

    # RoPE for all heads at once: rotate_half is a lane-dense matmul.
    q = q * cosf + _mm(q, rot) * sinf
    k = k * cosf + _mm(k, rot) * sinf

    wo = wo_ref[0]                               # [D, D]
    attn_out = jnp.zeros((SEQ, HIDDEN), jnp.float32)
    for h in range(N_HEADS):                     # static unroll; all data in VMEM
        c = h * HEAD_DIM
        qh = q[:, c:c + HEAD_DIM]                # [S, Dh]
        kh = k[:, c:c + HEAD_DIM]
        vh = v[:, c:c + HEAD_DIM]
        s = jnp.dot(qh, kh.T, preferred_element_type=jnp.float32) * ATTN_SCALE
        s = s + key_bias                         # mask padded keys only
        s = s - jnp.max(s, axis=-1, keepdims=True)
        p = jnp.exp(s)
        p = p * pl.reciprocal(jnp.sum(p, axis=-1, keepdims=True), approx=True)
        ho = jnp.dot(p, vh, preferred_element_type=jnp.float32)       # [S, Dh]
        # fold this head directly into the o-projection (lane-dense [S, D] output,
        # no per-head concatenation needed): concat(heads) @ Wo == sum_h ho @ Wo_h
        attn_out = attn_out + _mm(ho, wo[c:c + HEAD_DIM, :])
    x = x + attn_out

    # ---------------- SwiGLU MLP block ----------------
    hn = _rms(x, mnorm_ref[0])
    gu = _mm(hn, wgu_ref[0])                     # [S, 2F]  fused gate/up projection
    g = gu[:, 0:FFN]
    u = gu[:, FFN:2 * FFN]
    act = g * jax.nn.sigmoid(g) * u              # SiLU(gate) * up, f32 on VPU/EUP
    x = x + _mm(act, wdown_ref[0])

    x_scr[...] = x                               # carry residual to next layer step

    # ---- last layer step: final RMSNorm + masked mean pooling ----
    @pl.when(layer == last)
    def _():
        hfin = _rms(x, fnorm_ref[...])                                 # [S, D]
        num = jnp.dot(mask, hfin, preferred_element_type=jnp.float32)  # [1, D]
        den = jnp.maximum(jnp.sum(mask, axis=-1, keepdims=True), 1.0)  # [1, 1]
        out_ref[0] = (num * pl.reciprocal(den, approx=True)).astype(out_ref.dtype)


# ---------------- host-side parameter packing --------------------------------
def rope_tables(seq, dim):
    inv_freq = 1.0 / (10000.0 ** (jnp.arange(0, dim, 2, dtype=jnp.float32) / dim))
    t = jnp.arange(seq, dtype=jnp.float32)
    freqs = jnp.outer(t, inv_freq)                      # [S, Dh/2]
    emb = jnp.concatenate([freqs, freqs], axis=-1)      # [S, Dh]
    return jnp.cos(emb), jnp.sin(emb)


def rotate_half_matrix():
    # R such that x @ R == rotate_half(x) applied independently to every head block.
    half = HEAD_DIM // 2
    eye = jnp.eye(half, dtype=jnp.float32)
    blk = jnp.zeros((HEAD_DIM, HEAD_DIM), jnp.float32)
    blk = blk.at[half:, :half].set(-eye)    # out[:, :half] = -x[:, half:]
    blk = blk.at[:half, half:].set(eye)     # out[:, half:] =  x[:, :half]
    return jnp.kron(jnp.eye(N_HEADS, dtype=jnp.float32), blk)   # [D, D]


def init_params(key):
    keys = jax.random.split(key, 1 + N_LAYERS)

    def nrm(k, shape, s=0.02):
        return s * jax.random.normal(k, shape, jnp.float32)

    def lora_proj(k, din, dout):
        k1, k2, k3 = jax.random.split(k, 3)
        # NOTE: PEFT initializes LoRA B to zero; we use small nonzero values so
        # the LoRA contribution is numerically exercised (same compute formula).
        return (nrm(k1, (din, dout)), nrm(k2, (din, LORA_R)), nrm(k3, (LORA_R, dout), 0.01))

    params = {
        "embed": nrm(keys[0], (VOCAB, HIDDEN)),
        "final_norm": jnp.ones((HIDDEN,), jnp.float32),
        "layers": [],
    }
    for i in range(N_LAYERS):
        lk = jax.random.split(keys[1 + i], 7)
        params["layers"].append({
            "attn_norm": jnp.ones((HIDDEN,), jnp.float32),
            "mlp_norm": jnp.ones((HIDDEN,), jnp.float32),
            "q": lora_proj(lk[0], HIDDEN, HIDDEN),
            "k": lora_proj(lk[1], HIDDEN, HIDDEN),
            "v": lora_proj(lk[2], HIDDEN, HIDDEN),
            "o": lora_proj(lk[3], HIDDEN, HIDDEN),
            "gate": lora_proj(lk[4], HIDDEN, FFN),
            "up": lora_proj(lk[5], HIDDEN, FFN),
            "down": lora_proj(lk[6], FFN, HIDDEN),
        })
    return params


def pack_params(params):
    """Merge LoRA into base weights (PEFT merge: W + alpha/r * A@B), concatenate
    q/k/v and gate/up, stack per-layer, cast matmul weights to bf16."""
    def merge(p):
        w, a, b = p
        return w + LORA_SCALE * (a @ b)

    layers = params["layers"]
    cos, sin = rope_tables(SEQ, HEAD_DIM)
    return {
        "embed": params["embed"].astype(jnp.float32),
        "fnorm": params["final_norm"].reshape(1, HIDDEN).astype(jnp.float32),
        "anorm": jnp.stack([l["attn_norm"] for l in layers]).reshape(N_LAYERS, 1, HIDDEN),
        "mnorm": jnp.stack([l["mlp_norm"] for l in layers]).reshape(N_LAYERS, 1, HIDDEN),
        "wqkv": jnp.stack([jnp.concatenate(
            [merge(l["q"]), merge(l["k"]), merge(l["v"])], axis=1) for l in layers]
        ).astype(jnp.bfloat16),
        "wo": jnp.stack([merge(l["o"]) for l in layers]).astype(jnp.bfloat16),
        "wgu": jnp.stack([jnp.concatenate(
            [merge(l["gate"]), merge(l["up"])], axis=1) for l in layers]
        ).astype(jnp.bfloat16),
        "wdown": jnp.stack([merge(l["down"]) for l in layers]).astype(jnp.bfloat16),
        "cosf": jnp.tile(cos, (1, N_HEADS)),     # [S, D]
        "sinf": jnp.tile(sin, (1, N_HEADS)),     # [S, D]
        "rot": rotate_half_matrix(),             # [D, D]
    }


# ---------------- forward ----------------------------------------------------
@jax.jit
def encoding_model_forward(packed, token_ids, attn_mask):
    """Equivalent of EncodingModel.forward on pre-tokenized inputs.
    token_ids: int32 [B, S], attn_mask: float32 [B, S] -> embeddings [B, D]."""
    b, s = token_ids.shape
    ids3 = token_ids.reshape(b, s, 1).astype(jnp.int32)
    mask3 = attn_mask.reshape(b, 1, s).astype(jnp.float32)

    per_batch = lambda sh: pl.BlockSpec(sh, lambda bi, li: (bi, 0, 0))
    per_layer = lambda sh: pl.BlockSpec(sh, lambda bi, li: (li, 0, 0))
    const2 = lambda sh: pl.BlockSpec(sh, lambda bi, li: (0, 0))

    in_specs = [
        per_batch((1, s, 1)),                   # token ids
        per_batch((1, 1, s)),                   # attention mask
        const2((s, HIDDEN)),                    # cos (tiled per head)
        const2((s, HIDDEN)),                    # sin (tiled per head)
        const2((HIDDEN, HIDDEN)),               # rotate_half matrix
        const2((VOCAB, HIDDEN)),                # embedding table
        const2((1, HIDDEN)),                    # final norm weight
        per_layer((1, 1, HIDDEN)),              # attn norm weight
        per_layer((1, 1, HIDDEN)),              # mlp norm weight
        per_layer((1, HIDDEN, 3 * HIDDEN)),     # fused q/k/v weight
        per_layer((1, HIDDEN, HIDDEN)),         # o weight
        per_layer((1, HIDDEN, 2 * FFN)),        # fused gate/up weight
        per_layer((1, FFN, HIDDEN)),            # down weight
    ]
    out_spec = pl.BlockSpec((1, 1, HIDDEN), lambda bi, li: (bi, 0, 0))

    out = pl.pallas_call(
        _encoder_kernel,
        grid=(b, N_LAYERS),
        in_specs=in_specs,
        out_specs=out_spec,
        out_shape=jax.ShapeDtypeStruct((b, 1, HIDDEN), jnp.float32),
        scratch_shapes=[pltpu.VMEM((s, HIDDEN), jnp.float32)],   # residual stream
        compiler_params=pltpu.CompilerParams(
            dimension_semantics=("parallel", "arbitrary")),
    )(ids3, mask3, packed["cosf"], packed["sinf"], packed["rot"],
      packed["embed"], packed["fnorm"], packed["anorm"], packed["mnorm"],
      packed["wqkv"], packed["wo"], packed["wgu"], packed["wdown"])
    return out.reshape(b, HIDDEN)


# ---------------- demo -------------------------------------------------------
if __name__ == "__main__":
    root = jax.random.PRNGKey(0)
    k_params, k_ids = jax.random.split(root)

    params = init_params(k_params)
    packed = pack_params(params)

    token_ids = jax.random.randint(k_ids, (BATCH, SEQ), 0, VOCAB, dtype=jnp.int32)
    attn_mask = jnp.ones((BATCH, SEQ), jnp.float32)
    attn_mask = attn_mask.at[1, 6:].set(0.0)   # pretend second sequence has padding

    emb = encoding_model_forward(packed, token_ids, attn_mask)
    jax.block_until_ready(emb)
    assert emb.shape == (BATCH, HIDDEN) and emb.dtype == jnp.float32
    assert bool(jnp.all(jnp.isfinite(emb)))
    print("KERNEL_OK")
</pallas_src>

<mosaic_0001>
module attributes {stable_mosaic.version = 11 : i64} {
  func.func @_encoder_kernel(%arg0: i32, %arg1: i32, %arg2: memref<1x8x1xi32, #tpu.memory_space<vmem>>, %arg3: memref<1x1x8xf32, #tpu.memory_space<vmem>>, %arg4: memref<8x32xf32, #tpu.memory_space<vmem>>, %arg5: memref<8x32xf32, #tpu.memory_space<vmem>>, %arg6: memref<32x32xf32, #tpu.memory_space<vmem>>, %arg7: memref<128x32xf32, #tpu.memory_space<vmem>>, %arg8: memref<1x32xf32, #tpu.memory_space<vmem>>, %arg9: memref<1x1x32xf32, #tpu.memory_space<vmem>>, %arg10: memref<1x1x32xf32, #tpu.memory_space<vmem>>, %arg11: memref<1x32x96xbf16, #tpu.memory_space<vmem>>, %arg12: memref<1x32x32xbf16, #tpu.memory_space<vmem>>, %arg13: memref<1x32x128xbf16, #tpu.memory_space<vmem>>, %arg14: memref<1x64x32xbf16, #tpu.memory_space<vmem>>, %arg15: memref<1x1x32xf32, #tpu.memory_space<vmem>>, %arg16: memref<8x32xf32, #tpu.memory_space<vmem>>) attributes {dimension_semantics = [#tpu.dimension_semantics<parallel>, #tpu.dimension_semantics<arbitrary>], iteration_bounds = array<i64: 2, 2>, scalar_prefetch = 0 : i64, scratch_operands = 1 : i64, tpu.core_type = #tpu.core_type<tc>, window_params = [{transform_indices = @transform_0, window_bounds = array<i64: 1, 8, 1>}, {transform_indices = @transform_1, window_bounds = array<i64: 1, 1, 8>}, {pipeline_mode = #tpu.pipeline_mode<synchronous>, transform_indices = @transform_2, window_bounds = array<i64: 8, 32>}, {pipeline_mode = #tpu.pipeline_mode<synchronous>, transform_indices = @transform_3, window_bounds = array<i64: 8, 32>}, {pipeline_mode = #tpu.pipeline_mode<synchronous>, transform_indices = @transform_4, window_bounds = array<i64: 32, 32>}, {pipeline_mode = #tpu.pipeline_mode<synchronous>, transform_indices = @transform_5, window_bounds = array<i64: 128, 32>}, {pipeline_mode = #tpu.pipeline_mode<synchronous>, transform_indices = @transform_6, window_bounds = array<i64: 1, 32>}, {transform_indices = @transform_7, window_bounds = array<i64: 1, 1, 32>}, {transform_indices = @transform_8, window_bounds = array<i64: 1, 1, 32>}, {transform_indices = @transform_9, window_bounds = array<i64: 1, 32, 96>}, {transform_indices = @transform_10, window_bounds = array<i64: 1, 32, 32>}, {transform_indices = @transform_11, window_bounds = array<i64: 1, 32, 128>}, {transform_indices = @transform_12, window_bounds = array<i64: 1, 64, 32>}, {transform_indices = @transform_13, window_bounds = array<i64: 1, 1, 32>}]} {
    %c0_i32 = arith.constant 0 : i32
    %0 = arith.cmpi eq, %arg1, %c0_i32 : i32
    %1 = arith.extui %0 : i1 to i32
    %c0_i32_0 = arith.constant 0 : i32
    %2 = arith.cmpi ne, %1, %c0_i32_0 : i32
    scf.if %2 {
      %c0_70 = arith.constant 0 : index
      %c0_71 = arith.constant 0 : index
      %c0_72 = arith.constant 0 : index
      %178 = vector.load %arg2[%c0_70, %c0_71, %c0_72] : memref<1x8x1xi32, #tpu.memory_space<vmem>>, vector<1x8x1xi32>
      %179 = vector.shape_cast %178 : vector<1x8x1xi32> to vector<8x1xi32>
      %180 = tpu.iota {dimensions = array<i32: 1>} : vector<8x128xi32>
      %181 = vector.broadcast %179 : vector<8x1xi32> to vector<8x128xi32>
      %182 = arith.cmpi eq, %180, %181 : vector<8x128xi32>
      %183 = arith.extui %182 : vector<8x128xi1> to vector<8x128xi32>
      %184 = arith.sitofp %183 : vector<8x128xi32> to vector<8x128xf32>
      %c0_73 = arith.constant 0 : index
      %c0_74 = arith.constant 0 : index
      %185 = vector.load %arg7[%c0_73, %c0_74] : memref<128x32xf32, #tpu.memory_space<vmem>>, vector<128x32xf32>
      %cst_75 = arith.constant dense<0.000000e+00> : vector<8x32xf32>
      %186 = tpu.matmul %184, %185, %cst_75 {dimension_numbers = #tpu.dot_dimension_numbers<[1], [0], [0], [1], [0, 0, 1, 1], [], []>} : vector<8x128xf32>, vector<128x32xf32>, vector<8x32xf32> -> vector<8x32xf32>
      %c0_76 = arith.constant 0 : index
      %c0_77 = arith.constant 0 : index
      %187 = vector.load %arg16[%c0_76, %c0_77] : memref<8x32xf32, #tpu.memory_space<vmem>>, vector<8x32xf32>
      tpu.vector_store %arg16[%c0_76, %c0_77], %186 {strides = array<i32>} : memref<8x32xf32, #tpu.memory_space<vmem>>, vector<8x32xf32>,
    } else {
    }
    %c0 = arith.constant 0 : index
    %c0_1 = arith.constant 0 : index
    %c0_2 = arith.constant 0 : index
    %3 = vector.load %arg3[%c0, %c0_1, %c0_2] : memref<1x1x8xf32, #tpu.memory_space<vmem>>, vector<1x1x8xf32>
    %4 = vector.shape_cast %3 : vector<1x1x8xf32> to vector<1x8xf32>
    %cst = arith.constant 1.000000e+00 : f32
    %5 = vector.broadcast %cst : f32 to vector<1x8xf32>
    %6 = arith.subf %4, %5 : vector<1x8xf32>
    %cst_3 = arith.constant 1.000000e+09 : f32
    %7 = vector.broadcast %cst_3 : f32 to vector<1x8xf32>
    %8 = arith.mulf %6, %7 : vector<1x8xf32>
    %c0_4 = arith.constant 0 : index
    %c0_5 = arith.constant 0 : index
    %9 = vector.load %arg4[%c0_4, %c0_5] : memref<8x32xf32, #tpu.memory_space<vmem>>, vector<8x32xf32>
    %c0_6 = arith.constant 0 : index
    %c0_7 = arith.constant 0 : index
    %10 = vector.load %arg5[%c0_6, %c0_7] : memref<8x32xf32, #tpu.memory_space<vmem>>, vector<8x32xf32>
    %c0_8 = arith.constant 0 : index
    %c0_9 = arith.constant 0 : index
    %11 = vector.load %arg6[%c0_8, %c0_9] : memref<32x32xf32, #tpu.memory_space<vmem>>, vector<32x32xf32>
    %c0_10 = arith.constant 0 : index
    %c0_11 = arith.constant 0 : index
    %12 = vector.load %arg16[%c0_10, %c0_11] : memref<8x32xf32, #tpu.memory_space<vmem>>, vector<8x32xf32>
    %c0_12 = arith.constant 0 : index
    %c0_13 = arith.constant 0 : index
    %c0_14 = arith.constant 0 : index
    %13 = vector.load %arg9[%c0_12, %c0_13, %c0_14] : memref<1x1x32xf32, #tpu.memory_space<vmem>>, vector<1x1x32xf32>
    %14 = vector.shape_cast %13 : vector<1x1x32xf32> to vector<1x32xf32>
    %15 = arith.mulf %12, %12 : vector<8x32xf32>
    %cst_15 = arith.constant dense<0.000000e+00> : vector<8xf32>
    %16 = vector.multi_reduction <add>, %15, %cst_15 [1] : vector<8x32xf32> to vector<8xf32>
    %17 = vector.shape_cast %16 : vector<8xf32> to vector<8x1xf32>
    %cst_16 = arith.constant 3.200000e+01 : f32
    %18 = vector.broadcast %cst_16 : f32 to vector<8x1xf32>
    %19 = arith.divf %17, %18 : vector<8x1xf32>
    %cst_17 = arith.constant 9.99999974E-6 : f32
    %20 = vector.broadcast %cst_17 : f32 to vector<8x1xf32>
    %21 = arith.addf %19, %20 : vector<8x1xf32>
    %22 = math.rsqrt %21 : vector<8x1xf32>
    %23 = vector.broadcast %22 : vector<8x1xf32> to vector<8x32xf32>
    %24 = arith.mulf %12, %23 : vector<8x32xf32>
    %25 = vector.broadcast %14 : vector<1x32xf32> to vector<8x32xf32>
    %26 = arith.mulf %24, %25 : vector<8x32xf32>
    %c0_18 = arith.constant 0 : index
    %c0_19 = arith.constant 0 : index
    %c0_20 = arith.constant 0 : index
    %27 = vector.load %arg11[%c0_18, %c0_19, %c0_20] : memref<1x32x96xbf16, #tpu.memory_space<vmem>>, vector<1x32x96xbf16>
    %28 = vector.shape_cast %27 : vector<1x32x96xbf16> to vector<32x96xbf16>
    %29 = arith.truncf %26 : vector<8x32xf32> to vector<8x32xbf16>
    %cst_21 = arith.constant dense<0.000000e+00> : vector<8x96xf32>
    %30 = tpu.matmul %29, %28, %cst_21 {dimension_numbers = #tpu.dot_dimension_numbers<[1], [0], [0], [1], [0, 0, 1, 1], [], []>} : vector<8x32xbf16>, vector<32x96xbf16>, vector<8x96xf32> -> vector<8x96xf32>
    %31 = vector.extract_strided_slice %30 {offsets = [0, 0], sizes = [8, 32], strides = [1, 1]} : vector<8x96xf32> to vector<8x32xf32>
    %32 = vector.extract_strided_slice %30 {offsets = [0, 32], sizes = [8, 32], strides = [1, 1]} : vector<8x96xf32> to vector<8x32xf32>
    %33 = vector.extract_strided_slice %30 {offsets = [0, 64], sizes = [8, 32], strides = [1, 1]} : vector<8x96xf32> to vector<8x32xf32>
    %34 = arith.mulf %31, %9 : vector<8x32xf32>
    %cst_22 = arith.constant dense<0.000000e+00> : vector<8x32xf32>
    %35 = tpu.matmul %31, %11, %cst_22 {dimension_numbers = #tpu.dot_dimension_numbers<[1], [0], [0], [1], [0, 0, 1, 1], [], []>} : vector<8x32xf32>, vector<32x32xf32>, vector<8x32xf32> -> vector<8x32xf32>
    %36 = arith.mulf %35, %10 : vector<8x32xf32>
    %37 = arith.addf %34, %36 : vector<8x32xf32>
    %38 = arith.mulf %32, %9 : vector<8x32xf32>
    %cst_23 = arith.constant dense<0.000000e+00> : vector<8x32xf32>
    %39 = tpu.matmul %32, %11, %cst_23 {dimension_numbers = #tpu.dot_dimension_numbers<[1], [0], [0], [1], [0, 0, 1, 1], [], []>} : vector<8x32xf32>, vector<32x32xf32>, vector<8x32xf32> -> vector<8x32xf32>
    %40 = arith.mulf %39, %10 : vector<8x32xf32>
    %41 = arith.addf %38, %40 : vector<8x32xf32>
    %c0_24 = arith.constant 0 : index
    %c0_25 = arith.constant 0 : index
    %c0_26 = arith.constant 0 : index
    %42 = vector.load %arg12[%c0_24, %c0_25, %c0_26] : memref<1x32x32xbf16, #tpu.memory_space<vmem>>, vector<1x32x32xbf16>
    %43 = vector.shape_cast %42 : vector<1x32x32xbf16> to vector<32x32xbf16>
    %cst_27 = arith.constant 0.000000e+00 : f32
    %44 = vector.broadcast %cst_27 : f32 to vector<8x32xf32>
    %45 = vector.extract_strided_slice %37 {offsets = [0, 0], sizes = [8, 8], strides = [1, 1]} : vector<8x32xf32> to vector<8x8xf32>
    %46 = vector.extract_strided_slice %41 {offsets = [0, 0], sizes = [8, 8], strides = [1, 1]} : vector<8x32xf32> to vector<8x8xf32>
    %47 = vector.extract_strided_slice %33 {offsets = [0, 0], sizes = [8, 8], strides = [1, 1]} : vector<8x32xf32> to vector<8x8xf32>
    %48 = tpu.transpose %46, [1, 0] : vector<8x8xf32> -> vector<8x8xf32>
    %cst_28 = arith.constant dense<0.000000e+00> : vector<8x8xf32>
    %49 = tpu.matmul %45, %48, %cst_28 {dimension_numbers = #tpu.dot_dimension_numbers<[1], [0], [0], [1], [0, 0, 1, 1], [], []>} : vector<8x8xf32>, vector<8x8xf32>, vector<8x8xf32> -> vector<8x8xf32>
    %cst_29 = arith.constant 0.353553385 : f32
    %50 = vector.broadcast %cst_29 : f32 to vector<8x8xf32>
    %51 = arith.mulf %49, %50 : vector<8x8xf32>
    %52 = vector.broadcast %8 : vector<1x8xf32> to vector<8x8xf32>
    %53 = arith.addf %51, %52 : vector<8x8xf32>
    %cst_30 = arith.constant dense<0xFF800000> : vector<8xf32>
    %54 = vector.multi_reduction <maximumf>, %53, %cst_30 [1] : vector<8x8xf32> to vector<8xf32>
    %55 = vector.shape_cast %54 : vector<8xf32> to vector<8x1xf32>
    %56 = vector.broadcast %55 : vector<8x1xf32> to vector<8x8xf32>
    %57 = arith.subf %53, %56 : vector<8x8xf32>
    %58 = math.exp %57 : vector<8x8xf32>
    %cst_31 = arith.constant dense<0.000000e+00> : vector<8xf32>
    %59 = vector.multi_reduction <add>, %58, %cst_31 [1] : vector<8x8xf32> to vector<8xf32>
    %60 = vector.shape_cast %59 : vector<8xf32> to vector<8x1xf32>
    %61 = tpu.reciprocal %60 {approx = true} : vector<8x1xf32> -> vector<8x1xf32>
    %62 = vector.broadcast %61 : vector<8x1xf32> to vector<8x8xf32>
    %63 = arith.mulf %58, %62 : vector<8x8xf32>
    %cst_32 = arith.constant dense<0.000000e+00> : vector<8x8xf32>
    %64 = tpu.matmul %63, %47, %cst_32 {dimension_numbers = #tpu.dot_dimension_numbers<[1], [0], [0], [1], [0, 0, 1, 1], [], []>} : vector<8x8xf32>, vector<8x8xf32>, vector<8x8xf32> -> vector<8x8xf32>
    %65 = vector.extract_strided_slice %43 {offsets = [0, 0], sizes = [8, 32], strides = [1, 1]} : vector<32x32xbf16> to vector<8x32xbf16>
    %66 = arith.truncf %64 : vector<8x8xf32> to vector<8x8xbf16>
    %cst_33 = arith.constant dense<0.000000e+00> : vector<8x32xf32>
    %67 = tpu.matmul %66, %65, %cst_33 {dimension_numbers = #tpu.dot_dimension_numbers<[1], [0], [0], [1], [0, 0, 1, 1], [], []>} : vector<8x8xbf16>, vector<8x32xbf16>, vector<8x32xf32> -> vector<8x32xf32>
    %68 = arith.addf %44, %67 : vector<8x32xf32>
    %69 = vector.extract_strided_slice %37 {offsets = [0, 8], sizes = [8, 8], strides = [1, 1]} : vector<8x32xf32> to vector<8x8xf32>
    %70 = vector.extract_strided_slice %41 {offsets = [0, 8], sizes = [8, 8], strides = [1, 1]} : vector<8x32xf32> to vector<8x8xf32>
    %71 = vector.extract_strided_slice %33 {offsets = [0, 8], sizes = [8, 8], strides = [1, 1]} : vector<8x32xf32> to vector<8x8xf32>
    %72 = tpu.transpose %70, [1, 0] : vector<8x8xf32> -> vector<8x8xf32>
    %cst_34 = arith.constant dense<0.000000e+00> : vector<8x8xf32>
    %73 = tpu.matmul %69, %72, %cst_34 {dimension_numbers = #tpu.dot_dimension_numbers<[1], [0], [0], [1], [0, 0, 1, 1], [], []>} : vector<8x8xf32>, vector<8x8xf32>, vector<8x8xf32> -> vector<8x8xf32>
    %cst_35 = arith.constant 0.353553385 : f32
    %74 = vector.broadcast %cst_35 : f32 to vector<8x8xf32>
    %75 = arith.mulf %73, %74 : vector<8x8xf32>
    %76 = vector.broadcast %8 : vector<1x8xf32> to vector<8x8xf32>
    %77 = arith.addf %75, %76 : vector<8x8xf32>
    %cst_36 = arith.constant dense<0xFF800000> : vector<8xf32>
    %78 = vector.multi_reduction <maximumf>, %77, %cst_36 [1] : vector<8x8xf32> to vector<8xf32>
    %79 = vector.shape_cast %78 : vector<8xf32> to vector<8x1xf32>
    %80 = vector.broadcast %79 : vector<8x1xf32> to vector<8x8xf32>
    %81 = arith.subf %77, %80 : vector<8x8xf32>
    %82 = math.exp %81 : vector<8x8xf32>
    %cst_37 = arith.constant dense<0.000000e+00> : vector<8xf32>
    %83 = vector.multi_reduction <add>, %82, %cst_37 [1] : vector<8x8xf32> to vector<8xf32>
    %84 = vector.shape_cast %83 : vector<8xf32> to vector<8x1xf32>
    %85 = tpu.reciprocal %84 {approx = true} : vector<8x1xf32> -> vector<8x1xf32>
    %86 = vector.broadcast %85 : vector<8x1xf32> to vector<8x8xf32>
    %87 = arith.mulf %82, %86 : vector<8x8xf32>
    %cst_38 = arith.constant dense<0.000000e+00> : vector<8x8xf32>
    %88 = tpu.matmul %87, %71, %cst_38 {dimension_numbers = #tpu.dot_dimension_numbers<[1], [0], [0], [1], [0, 0, 1, 1], [], []>} : vector<8x8xf32>, vector<8x8xf32>, vector<8x8xf32> -> vector<8x8xf32>
    %89 = vector.extract_strided_slice %43 {offsets = [8, 0], sizes = [8, 32], strides = [1, 1]} : vector<32x32xbf16> to vector<8x32xbf16>
    %90 = arith.truncf %88 : vector<8x8xf32> to vector<8x8xbf16>
    %cst_39 = arith.constant dense<0.000000e+00> : vector<8x32xf32>
    %91 = tpu.matmul %90, %89, %cst_39 {dimension_numbers = #tpu.dot_dimension_numbers<[1], [0], [0], [1], [0, 0, 1, 1], [], []>} : vector<8x8xbf16>, vector<8x32xbf16>, vector<8x32xf32> -> vector<8x32xf32>
    %92 = arith.addf %68, %91 : vector<8x32xf32>
    %93 = vector.extract_strided_slice %37 {offsets = [0, 16], sizes = [8, 8], strides = [1, 1]} : vector<8x32xf32> to vector<8x8xf32>
    %94 = vector.extract_strided_slice %41 {offsets = [0, 16], sizes = [8, 8], strides = [1, 1]} : vector<8x32xf32> to vector<8x8xf32>
    %95 = vector.extract_strided_slice %33 {offsets = [0, 16], sizes = [8, 8], strides = [1, 1]} : vector<8x32xf32> to vector<8x8xf32>
    %96 = tpu.transpose %94, [1, 0] : vector<8x8xf32> -> vector<8x8xf32>
    %cst_40 = arith.constant dense<0.000000e+00> : vector<8x8xf32>
    %97 = tpu.matmul %93, %96, %cst_40 {dimension_numbers = #tpu.dot_dimension_numbers<[1], [0], [0], [1], [0, 0, 1, 1], [], []>} : vector<8x8xf32>, vector<8x8xf32>, vector<8x8xf32> -> vector<8x8xf32>
    %cst_41 = arith.constant 0.353553385 : f32
    %98 = vector.broadcast %cst_41 : f32 to vector<8x8xf32>
    %99 = arith.mulf %97, %98 : vector<8x8xf32>
    %100 = vector.broadcast %8 : vector<1x8xf32> to vector<8x8xf32>
    %101 = arith.addf %99, %100 : vector<8x8xf32>
    %cst_42 = arith.constant dense<0xFF800000> : vector<8xf32>
    %102 = vector.multi_reduction <maximumf>, %101, %cst_42 [1] : vector<8x8xf32> to vector<8xf32>
    %103 = vector.shape_cast %102 : vector<8xf32> to vector<8x1xf32>
    %104 = vector.broadcast %103 : vector<8x1xf32> to vector<8x8xf32>
    %105 = arith.subf %101, %104 : vector<8x8xf32>
    %106 = math.exp %105 : vector<8x8xf32>
    %cst_43 = arith.constant dense<0.000000e+00> : vector<8xf32>
    %107 = vector.multi_reduction <add>, %106, %cst_43 [1] : vector<8x8xf32> to vector<8xf32>
    %108 = vector.shape_cast %107 : vector<8xf32> to vector<8x1xf32>
    %109 = tpu.reciprocal %108 {approx = true} : vector<8x1xf32> -> vector<8x1xf32>
    %110 = vector.broadcast %109 : vector<8x1xf32> to vector<8x8xf32>
    %111 = arith.mulf %106, %110 : vector<8x8xf32>
    %cst_44 = arith.constant dense<0.000000e+00> : vector<8x8xf32>
    %112 = tpu.matmul %111, %95, %cst_44 {dimension_numbers = #tpu.dot_dimension_numbers<[1], [0], [0], [1], [0, 0, 1, 1], [], []>} : vector<8x8xf32>, vector<8x8xf32>, vector<8x8xf32> -> vector<8x8xf32>
    %113 = vector.extract_strided_slice %43 {offsets = [16, 0], sizes = [8, 32], strides = [1, 1]} : vector<32x32xbf16> to vector<8x32xbf16>
    %114 = arith.truncf %112 : vector<8x8xf32> to vector<8x8xbf16>
    %cst_45 = arith.constant dense<0.000000e+00> : vector<8x32xf32>
    %115 = tpu.matmul %114, %113, %cst_45 {dimension_numbers = #tpu.dot_dimension_numbers<[1], [0], [0], [1], [0, 0, 1, 1], [], []>} : vector<8x8xbf16>, vector<8x32xbf16>, vector<8x32xf32> -> vector<8x32xf32>
    %116 = arith.addf %92, %115 : vector<8x32xf32>
    %117 = vector.extract_strided_slice %37 {offsets = [0, 24], sizes = [8, 8], strides = [1, 1]} : vector<8x32xf32> to vector<8x8xf32>
    %118 = vector.extract_strided_slice %41 {offsets = [0, 24], sizes = [8, 8], strides = [1, 1]} : vector<8x32xf32> to vector<8x8xf32>
    %119 = vector.extract_strided_slice %33 {offsets = [0, 24], sizes = [8, 8], strides = [1, 1]} : vector<8x32xf32> to vector<8x8xf32>
    %120 = tpu.transpose %118, [1, 0] : vector<8x8xf32> -> vector<8x8xf32>
    %cst_46 = arith.constant dense<0.000000e+00> : vector<8x8xf32>
    %121 = tpu.matmul %117, %120, %cst_46 {dimension_numbers = #tpu.dot_dimension_numbers<[1], [0], [0], [1], [0, 0, 1, 1], [], []>} : vector<8x8xf32>, vector<8x8xf32>, vector<8x8xf32> -> vector<8x8xf32>
    %cst_47 = arith.constant 0.353553385 : f32
    %122 = vector.broadcast %cst_47 : f32 to vector<8x8xf32>
    %123 = arith.mulf %121, %122 : vector<8x8xf32>
    %124 = vector.broadcast %8 : vector<1x8xf32> to vector<8x8xf32>
    %125 = arith.addf %123, %124 : vector<8x8xf32>
    %cst_48 = arith.constant dense<0xFF800000> : vector<8xf32>
    %126 = vector.multi_reduction <maximumf>, %125, %cst_48 [1] : vector<8x8xf32> to vector<8xf32>
    %127 = vector.shape_cast %126 : vector<8xf32> to vector<8x1xf32>
    %128 = vector.broadcast %127 : vector<8x1xf32> to vector<8x8xf32>
    %129 = arith.subf %125, %128 : vector<8x8xf32>
    %130 = math.exp %129 : vector<8x8xf32>
    %cst_49 = arith.constant dense<0.000000e+00> : vector<8xf32>
    %131 = vector.multi_reduction <add>, %130, %cst_49 [1] : vector<8x8xf32> to vector<8xf32>
    %132 = vector.shape_cast %131 : vector<8xf32> to vector<8x1xf32>
    %133 = tpu.reciprocal %132 {approx = true} : vector<8x1xf32> -> vector<8x1xf32>
    %134 = vector.broadcast %133 : vector<8x1xf32> to vector<8x8xf32>
    %135 = arith.mulf %130, %134 : vector<8x8xf32>
    %cst_50 = arith.constant dense<0.000000e+00> : vector<8x8xf32>
    %136 = tpu.matmul %135, %119, %cst_50 {dimension_numbers = #tpu.dot_dimension_numbers<[1], [0], [0], [1], [0, 0, 1, 1], [], []>} : vector<8x8xf32>, vector<8x8xf32>, vector<8x8xf32> -> vector<8x8xf32>
    %137 = vector.extract_strided_slice %43 {offsets = [24, 0], sizes = [8, 32], strides = [1, 1]} : vector<32x32xbf16> to vector<8x32xbf16>
    %138 = arith.truncf %136 : vector<8x8xf32> to vector<8x8xbf16>
    %cst_51 = arith.constant dense<0.000000e+00> : vector<8x32xf32>
    %139 = tpu.matmul %138, %137, %cst_51 {dimension_numbers = #tpu.dot_dimension_numbers<[1], [0], [0], [1], [0, 0, 1, 1], [], []>} : vector<8x8xbf16>, vector<8x32xbf16>, vector<8x32xf32> -> vector<8x32xf32>
    %140 = arith.addf %116, %139 : vector<8x32xf32>
    %141 = arith.addf %12, %140 : vector<8x32xf32>
    %c0_52 = arith.constant 0 : index
    %c0_53 = arith.constant 0 : index
    %c0_54 = arith.constant 0 : index
    %142 = vector.load %arg10[%c0_52, %c0_53, %c0_54] : memref<1x1x32xf32, #tpu.memory_space<vmem>>, vector<1x1x32xf32>
    %143 = vector.shape_cast %142 : vector<1x1x32xf32> to vector<1x32xf32>
    %144 = arith.mulf %141, %141 : vector<8x32xf32>
    %cst_55 = arith.constant dense<0.000000e+00> : vector<8xf32>
    %145 = vector.multi_reduction <add>, %144, %cst_55 [1] : vector<8x32xf32> to vector<8xf32>
    %146 = vector.shape_cast %145 : vector<8xf32> to vector<8x1xf32>
    %cst_56 = arith.constant 3.200000e+01 : f32
    %147 = vector.broadcast %cst_56 : f32 to vector<8x1xf32>
    %148 = arith.divf %146, %147 : vector<8x1xf32>
    %cst_57 = arith.constant 9.99999974E-6 : f32
    %149 = vector.broadcast %cst_57 : f32 to vector<8x1xf32>
    %150 = arith.addf %148, %149 : vector<8x1xf32>
    %151 = math.rsqrt %150 : vector<8x1xf32>
    %152 = vector.broadcast %151 : vector<8x1xf32> to vector<8x32xf32>
    %153 = arith.mulf %141, %152 : vector<8x32xf32>
    %154 = vector.broadcast %143 : vector<1x32xf32> to vector<8x32xf32>
    %155 = arith.mulf %153, %154 : vector<8x32xf32>
    %c0_58 = arith.constant 0 : index
    %c0_59 = arith.constant 0 : index
    %c0_60 = arith.constant 0 : index
    %156 = vector.load %arg13[%c0_58, %c0_59, %c0_60] : memref<1x32x128xbf16, #tpu.memory_space<vmem>>, vector<1x32x128xbf16>
    %157 = vector.shape_cast %156 : vector<1x32x128xbf16> to vector<32x128xbf16>
    %158 = arith.truncf %155 : vector<8x32xf32> to vector<8x32xbf16>
    %cst_61 = arith.constant dense<0.000000e+00> : vector<8x128xf32>
    %159 = tpu.matmul %158, %157, %cst_61 {dimension_numbers = #tpu.dot_dimension_numbers<[1], [0], [0], [1], [0, 0, 1, 1], [], []>} : vector<8x32xbf16>, vector<32x128xbf16>, vector<8x128xf32> -> vector<8x128xf32>
    %160 = vector.extract_strided_slice %159 {offsets = [0, 0], sizes = [8, 64], strides = [1, 1]} : vector<8x128xf32> to vector<8x64xf32>
    %161 = vector.extract_strided_slice %159 {offsets = [0, 64], sizes = [8, 64], strides = [1, 1]} : vector<8x128xf32> to vector<8x64xf32>
    %162 = arith.negf %160 : vector<8x64xf32>
    %163 = math.exp %162 : vector<8x64xf32>
    %cst_62 = arith.constant 1.000000e+00 : f32
    %164 = vector.broadcast %cst_62 : f32 to vector<8x64xf32>
    %165 = arith.addf %164, %163 : vector<8x64xf32>
    %166 = arith.divf %164, %165 : vector<8x64xf32>
    %167 = arith.mulf %160, %166 : vector<8x64xf32>
    %168 = arith.mulf %167, %161 : vector<8x64xf32>
    %c0_63 = arith.constant 0 : index
    %c0_64 = arith.constant 0 : index
    %c0_65 = arith.constant 0 : index
    %169 = vector.load %arg14[%c0_63, %c0_64, %c0_65] : memref<1x64x32xbf16, #tpu.memory_space<vmem>>, vector<1x64x32xbf16>
    %170 = vector.shape_cast %169 : vector<1x64x32xbf16> to vector<64x32xbf16>
    %171 = arith.truncf %168 : vector<8x64xf32> to vector<8x64xbf16>
    %cst_66 = arith.constant dense<0.000000e+00> : vector<8x32xf32>
    %172 = tpu.matmul %171, %170, %cst_66 {dimension_numbers = #tpu.dot_dimension_numbers<[1], [0], [0], [1], [0, 0, 1, 1], [], []>} : vector<8x64xbf16>, vector<64x32xbf16>, vector<8x32xf32> -> vector<8x32xf32>
    %173 = arith.addf %141, %172 : vector<8x32xf32>
    %c0_67 = arith.constant 0 : index
    %c0_68 = arith.constant 0 : index
    %174 = vector.load %arg16[%c0_67, %c0_68] : memref<8x32xf32, #tpu.memory_space<vmem>>, vector<8x32xf32>
    tpu.vector_store %arg16[%c0_67, %c0_68], %173 {strides = array<i32>} : memref<8x32xf32, #tpu.memory_space<vmem>>, vector<8x32xf32>,
    %c1_i32 = arith.constant 1 : i32
    %175 = arith.cmpi eq, %arg1, %c1_i32 : i32
    %176 = arith.extui %175 : i1 to i32
    %c0_i32_69 = arith.constant 0 : i32
    %177 = arith.cmpi ne, %176, %c0_i32_69 : i32
    scf.if %177 {
      %c0_70 = arith.constant 0 : index
      %c0_71 = arith.constant 0 : index
      %178 = vector.load %arg8[%c0_70, %c0_71] : memref<1x32xf32, #tpu.memory_space<vmem>>, vector<1x32xf32>
      %179 = arith.mulf %173, %173 : vector<8x32xf32>
      %cst_72 = arith.constant dense<0.000000e+00> : vector<8xf32>
      %180 = vector.multi_reduction <add>, %179, %cst_72 [1] : vector<8x32xf32> to vector<8xf32>
      %181 = vector.shape_cast %180 : vector<8xf32> to vector<8x1xf32>
      %cst_73 = arith.constant 3.200000e+01 : f32
      %182 = vector.broadcast %cst_73 : f32 to vector<8x1xf32>
      %183 = arith.divf %181, %182 : vector<8x1xf32>
      %cst_74 = arith.constant 9.99999974E-6 : f32
      %184 = vector.broadcast %cst_74 : f32 to vector<8x1xf32>
      %185 = arith.addf %183, %184 : vector<8x1xf32>
      %186 = math.rsqrt %185 : vector<8x1xf32>
      %187 = vector.broadcast %186 : vector<8x1xf32> to vector<8x32xf32>
      %188 = arith.mulf %173, %187 : vector<8x32xf32>
      %189 = vector.broadcast %178 : vector<1x32xf32> to vector<8x32xf32>
      %190 = arith.mulf %188, %189 : vector<8x32xf32>
      %cst_75 = arith.constant dense<0.000000e+00> : vector<1x32xf32>
      %191 = tpu.matmul %4, %190, %cst_75 {dimension_numbers = #tpu.dot_dimension_numbers<[1], [0], [0], [1], [0, 0, 1, 1], [], []>} : vector<1x8xf32>, vector<8x32xf32>, vector<1x32xf32> -> vector<1x32xf32>
      %cst_76 = arith.constant dense<0.000000e+00> : vector<1xf32>
      %192 = vector.multi_reduction <add>, %4, %cst_76 [1] : vector<1x8xf32> to vector<1xf32>
      %193 = vector.shape_cast %192 : vector<1xf32> to vector<1x1xf32>
      %cst_77 = arith.constant 1.000000e+00 : f32
      %194 = vector.broadcast %cst_77 : f32 to vector<1x1xf32>
      %195 = arith.maximumf %193, %194 : vector<1x1xf32>
      %196 = tpu.reciprocal %195 {approx = true} : vector<1x1xf32> -> vector<1x1xf32>
      %197 = vector.broadcast %196 : vector<1x1xf32> to vector<1x32xf32>
      %198 = arith.mulf %191, %197 : vector<1x32xf32>
      %c0_78 = arith.constant 0 : index
      %c0_79 = arith.constant 0 : index
      %c0_80 = arith.constant 0 : index
      %199 = vector.load %arg15[%c0_78, %c0_79, %c0_80] : memref<1x1x32xf32, #tpu.memory_space<vmem>>, vector<1x1x32xf32>
      %200 = vector.shape_cast %199 : vector<1x1x32xf32> to vector<1x32xf32>
      %201 = vector.shape_cast %198 : vector<1x32xf32> to vector<1x1x32xf32>
      tpu.vector_store %arg15[%c0_78, %c0_79, %c0_80], %201 {strides = array<i32>} : memref<1x1x32xf32, #tpu.memory_space<vmem>>, vector<1x1x32xf32>,
    } else {
    }
    return
  }
  func.func @transform_0(%arg0: i32, %arg1: i32) -> (i32, i32, i32) {
    %c0_i32 = arith.constant 0 : i32
    %c0_i32_0 = arith.constant 0 : i32
    %c0_i32_1 = arith.constant 0 : i32
    return %arg0, %c0_i32, %c0_i32_0 : i32, i32, i32
  }
  func.func @transform_1(%arg0: i32, %arg1: i32) -> (i32, i32, i32) {
    %c0_i32 = arith.constant 0 : i32
    %c0_i32_0 = arith.constant 0 : i32
    %c0_i32_1 = arith.constant 0 : i32
    return %arg0, %c0_i32, %c0_i32_0 : i32, i32, i32
  }
  func.func @transform_2(%arg0: i32, %arg1: i32) -> (i32, i32) {
    %c0_i32 = arith.constant 0 : i32
    %c0_i32_0 = arith.constant 0 : i32
    %c0_i32_1 = arith.constant 0 : i32
    return %c0_i32, %c0_i32_0 : i32, i32
  }
  func.func @transform_3(%arg0: i32, %arg1: i32) -> (i32, i32) {
    %c0_i32 = arith.constant 0 : i32
    %c0_i32_0 = arith.constant 0 : i32
    %c0_i32_1 = arith.constant 0 : i32
    return %c0_i32, %c0_i32_0 : i32, i32
  }
  func.func @transform_4(%arg0: i32, %arg1: i32) -> (i32, i32) {
    %c0_i32 = arith.constant 0 : i32
    %c0_i32_0 = arith.constant 0 : i32
    %c0_i32_1 = arith.constant 0 : i32
    return %c0_i32, %c0_i32_0 : i32, i32
  }
  func.func @transform_5(%arg0: i32, %arg1: i32) -> (i32, i32) {
    %c0_i32 = arith.constant 0 : i32
    %c0_i32_0 = arith.constant 0 : i32
    %c0_i32_1 = arith.constant 0 : i32
    return %c0_i32, %c0_i32_0 : i32, i32
  }
  func.func @transform_6(%arg0: i32, %arg1: i32) -> (i32, i32) {
    %c0_i32 = arith.constant 0 : i32
    %c0_i32_0 = arith.constant 0 : i32
    %c0_i32_1 = arith.constant 0 : i32
    return %c0_i32, %c0_i32_0 : i32, i32
  }
  func.func @transform_7(%arg0: i32, %arg1: i32) -> (i32, i32, i32) {
    %c0_i32 = arith.constant 0 : i32
    %c0_i32_0 = arith.constant 0 : i32
    %c0_i32_1 = arith.constant 0 : i32
    return %arg1, %c0_i32, %c0_i32_0 : i32, i32, i32
  }
  func.func @transform_8(%arg0: i32, %arg1: i32) -> (i32, i32, i32) {
    %c0_i32 = arith.constant 0 : i32
    %c0_i32_0 = arith.constant 0 : i32
    %c0_i32_1 = arith.constant 0 : i32
    return %arg1, %c0_i32, %c0_i32_0 : i32, i32, i32
  }
  func.func @transform_9(%arg0: i32, %arg1: i32) -> (i32, i32, i32) {
    %c0_i32 = arith.constant 0 : i32
    %c0_i32_0 = arith.constant 0 : i32
    %c0_i32_1 = arith.constant 0 : i32
    return %arg1, %c0_i32, %c0_i32_0 : i32, i32, i32
  }
  func.func @transform_10(%arg0: i32, %arg1: i32) -> (i32, i32, i32) {
    %c0_i32 = arith.constant 0 : i32
    %c0_i32_0 = arith.constant 0 : i32
    %c0_i32_1 = arith.constant 0 : i32
    return %arg1, %c0_i32, %c0_i32_0 : i32, i32, i32
  }
  func.func @transform_11(%arg0: i32, %arg1: i32) -> (i32, i32, i32) {
    %c0_i32 = arith.constant 0 : i32
    %c0_i32_0 = arith.constant 0 : i32
    %c0_i32_1 = arith.constant 0 : i32
    return %arg1, %c0_i32, %c0_i32_0 : i32, i32, i32
  }
  func.func @transform_12(%arg0: i32, %arg1: i32) -> (i32, i32, i32) {
    %c0_i32 = arith.constant 0 : i32
    %c0_i32_0 = arith.constant 0 : i32
    %c0_i32_1 = arith.constant 0 : i32
    return %arg1, %c0_i32, %c0_i32_0 : i32, i32, i32
  }
  func.func @transform_13(%arg0: i32, %arg1: i32) -> (i32, i32, i32) {
    %c0_i32 = arith.constant 0 : i32
    %c0_i32_0 = arith.constant 0 : i32
    %c0_i32_1 = arith.constant 0 : i32
    return %arg0, %c0_i32, %c0_i32_0 : i32, i32, i32
  }
}

</mosaic_0001>

<llo_original>
// kernel: encoding_model_forward.1
$region0: #{encoding_model_forward.1}
  #allocation0 [shape = 'u32[]', space=smem, size = 0x4, offset = 0x4, fixed_abs, tag = 'smem constant byte address 0x4 - core index']
  #allocation1 [shape = 'u32[72,128]{1,0:T(1,128)}', space=vmem, size = 0x9000, scoped, tag = 'internal scratch']
  #allocation2 [shape = 'f32[8,32]{1,0:T(8,128)}', space=vmem, size = 0x1000, scoped, tag = 'scratch operand']
  %s0 = inlined_call_operand.vmem [shape: s32[2,8,1], index: 0, kind: input, shape index: {}]
  %s1 = inlined_call_operand.vmem [shape: f32[2,1,8], index: 1, kind: input, shape index: {}]
  %s2 = inlined_call_operand.vmem [shape: f32[8,32], index: 2, kind: input, shape index: {}]
  %s3 = inlined_call_operand.vmem [shape: f32[8,32], index: 3, kind: input, shape index: {}]
  %s4 = inlined_call_operand.vmem [shape: f32[32,32], index: 4, kind: input, shape index: {}]
  %s5 = inlined_call_operand.vmem [shape: f32[128,32], index: 5, kind: input, shape index: {}]
  %s6 = inlined_call_operand.vmem [shape: f32[1,32], index: 6, kind: input, shape index: {}]
  %s7 = inlined_call_operand.vmem [shape: f32[2,1,32], index: 7, kind: input, shape index: {}]
  %s8 = inlined_call_operand.vmem [shape: f32[2,1,32], index: 8, kind: input, shape index: {}]
  %s9 = inlined_call_operand.vmem [shape: bf16[2,32,96], index: 9, kind: input, shape index: {}]
  %s10 = inlined_call_operand.vmem [shape: bf16[2,32,32], index: 10, kind: input, shape index: {}]
  %s11 = inlined_call_operand.vmem [shape: bf16[2,32,128], index: 11, kind: input, shape index: {}]
  %s12 = inlined_call_operand.vmem [shape: bf16[2,64,32], index: 12, kind: input, shape index: {}]
  %s13 = inlined_call_operand.hbm [shape: f32[2,1,32], index: 13, kind: output, shape index: {}]
  %s14 = sld [smem:[#allocation0]]
  $region93: #{encoding_model_forward.1} parent=0
    _
  %s16 = ssub.s32 1, %s14
  %s17 = scalar_select 0, %s16, %s14
  $region1: #{encoding_model_forward.1} parent=0
    #allocation3 [shape = 'u8[1024]{0}', space=vmem, size = 0x400, scoped, tag = 'output window, operand 0']
    #allocation4 [shape = 's32[2]{0}', space=sflag, size = 0x8, scoped, tag = 'scoped memory for encoding_model_forward.1']
    %18 = vsyncpa [#allocation4], 0
    %s19 = scalar_lea.sflag [#allocation4], 1
    %20 = vsyncpa %s19, 0
    loop: start=0, step=1, limit=6
    $region2: #{encoding_model_forward.1} parent=1 // loop_pre_header
      _
    $region3: #{encoding_model_forward.1} parent=1 // loop_header
      %s22 = sphi 0, %s26
      %p23 = scmp.ge.s32.totalorder %s22, 6
      %s29 = sphi 0, %s41
      %s30 = sphi 0, %s37
      %s31 = sphi 0, %s29
      %s32 = sphi 0, %s30
      %s33 = sphi 0, %s31
      %s34 = sphi 0, %s32
      %s44 = sphi 0, %s46
      %s47 = sphi 0, %s44
      %s48 = sphi 0, %s47
      %s64 = sphi 0, %s48
      %s70 = sphi 0, %s72
      %s73 = sphi 0, %s70
      %s74 = sphi 0, %s73
      %s90 = sphi 0, %s74
      %s94 = sphi 0, %s94
      %s96 = sphi 0, %s94
      %s97 = sphi 0, %s96
      %s111 = sphi 0, %s97
      %s115 = sphi 0, %s115
      %s117 = sphi 0, %s115
      %s118 = sphi 0, %s117
      %s132 = sphi 0, %s118
      %s136 = sphi 0, %s136
      %s138 = sphi 0, %s136
      %s139 = sphi 0, %s138
      %s153 = sphi 0, %s139
      %s157 = sphi 0, %s157
      %s159 = sphi 0, %s157
      %s160 = sphi 0, %s159
      %s174 = sphi 0, %s160
      %s178 = sphi 0, %s178
      %s180 = sphi 0, %s178
      %s181 = sphi 0, %s180
      %s195 = sphi 0, %s181
      %s201 = sphi 0, %s203
      %s204 = sphi 0, %s201
      %s205 = sphi 0, %s204
      %s221 = sphi 0, %s205
      %s227 = sphi 0, %s229
      %s230 = sphi 0, %s227
      %s231 = sphi 0, %s230
      %s247 = sphi 0, %s231
      %s253 = sphi 0, %s255
      %s256 = sphi 0, %s253
      %s257 = sphi 0, %s256
      %s273 = sphi 0, %s257
      %s279 = sphi 0, %s281
      %s282 = sphi 0, %s279
      %s283 = sphi 0, %s282
      %s299 = sphi 0, %s283
      %s305 = sphi 0, %s307
      %s308 = sphi 0, %s305
      %s309 = sphi 0, %s308
      %s325 = sphi 0, %s309
      %s331 = sphi 0, %s333
      %s334 = sphi 0, %s331
      %s335 = sphi 0, %s334
      %s351 = sphi 0, %s335
      %s357 = sphi 0, %s359
      %s360 = sphi 0, %s357
      %s361 = sphi 0, %s360
      %s377 = sphi 0, %s361
    $region4: #{encoding_model_forward.1} parent=1 // loop_header_branch
      %25 = sbr.rel (%p23) target = $region8
    $region5: #{encoding_model_forward.1} parent=1 // loop_body
      %s27 = ssub.s32 %s22, 1
      %s28 = ssub.s32 %s22, 2
      %s35 = sadd.s32 1, %s30
      %p36 = scmp.ge.s32.totalorder %s35, 2
      %s37 = scalar_select %p36, 0, %s35
      %s38 = sadd.s32 1, %s29
      %s39 = scalar_select %p36, %s38, %s29
      %p40 = scmp.ge.s32.totalorder %s39, 2
      %s41 = scalar_select %p40, 0, %s39
      %s42 = ssub.s32 %s29, %s41
      %p43 = scmp.eq.s32.totalorder %s42, 0
      %s45 = sadd.s32 %s44, 1
      %s46 = scalar_select %p43, %s44, %s45
      %p49 = pneg %p43
      %p50 = scmp.eq.s32.totalorder %s22, 3
      %p51 = por %p49, %p50
      %p52 = scmp.ne.s32.totalorder %s44, %s47
      %p53 = scmp.eq.s32.totalorder %s22, 0
      %p54 = por %p52, %p53
      %p55 = scmp.ne.s32.totalorder %s44, %s47
      %p56 = scmp.eq.s32.totalorder %s27, 3
      %p57 = por %p55, %p56
      %p58 = scmp.ne.s32.totalorder %s47, %s48
      %p59 = scmp.eq.s32.totalorder %s27, 0
      %p60 = por %p58, %p59
      %p61 = scmp.ne.s32.totalorder %s47, %s48
      %p62 = scmp.eq.s32.totalorder %s28, 3
      %p63 = por %p61, %p62
      %p65 = scmp.ne.s32.totalorder %s48, %s64
      %p66 = scmp.eq.s32.totalorder %s28, 0
      %p67 = por %p65, %p66
      %s68 = ssub.s32 %s29, %s41
      %p69 = scmp.eq.s32.totalorder %s68, 0
      %s71 = sadd.s32 %s70, 1
      %s72 = scalar_select %p69, %s70, %s71
      %p75 = pneg %p69
      %p76 = scmp.eq.s32.totalorder %s22, 3
      %p77 = por %p75, %p76
      %p78 = scmp.ne.s32.totalorder %s70, %s73
      %p79 = scmp.eq.s32.totalorder %s22, 0
      %p80 = por %p78, %p79
      %p81 = scmp.ne.s32.totalorder %s70, %s73
      %p82 = scmp.eq.s32.totalorder %s27, 3
      %p83 = por %p81, %p82
      %p84 = scmp.ne.s32.totalorder %s73, %s74
      %p85 = scmp.eq.s32.totalorder %s27, 0
      %p86 = por %p84, %p85
      %p87 = scmp.ne.s32.totalorder %s73, %s74
      %p88 = scmp.eq.s32.totalorder %s28, 3
      %p89 = por %p87, %p88
      %p91 = scmp.ne.s32.totalorder %s74, %s90
      %p92 = scmp.eq.s32.totalorder %s28, 0
      %p93 = por %p91, %p92
      %s95 = sadd.s32 %s94, 1
      %p98 = scmp.eq.s32.totalorder %s22, 3
      %p99 = scmp.ne.s32.totalorder %s94, %s96
      %p100 = scmp.eq.s32.totalorder %s22, 0
      %p101 = por %p99, %p100
      %p102 = scmp.ne.s32.totalorder %s94, %s96
      %p103 = scmp.eq.s32.totalorder %s27, 3
      %p104 = por %p102, %p103
      %p105 = scmp.ne.s32.totalorder %s96, %s97
      %p106 = scmp.eq.s32.totalorder %s27, 0
      %p107 = por %p105, %p106
      %p108 = scmp.ne.s32.totalorder %s96, %s97
      %p109 = scmp.eq.s32.totalorder %s28, 3
      %p110 = por %p108, %p109
      %p112 = scmp.ne.s32.totalorder %s97, %s111
      %p113 = scmp.eq.s32.totalorder %s28, 0
      %p114 = por %p112, %p113
      %s116 = sadd.s32 %s115, 1
      %p119 = scmp.eq.s32.totalorder %s22, 3
      %p120 = scmp.ne.s32.totalorder %s115, %s117
      %p121 = scmp.eq.s32.totalorder %s22, 0
      %p122 = por %p120, %p121
      %p123 = scmp.ne.s32.totalorder %s115, %s117
      %p124 = scmp.eq.s32.totalorder %s27, 3
      %p125 = por %p123, %p124
      %p126 = scmp.ne.s32.totalorder %s117, %s118
      %p127 = scmp.eq.s32.totalorder %s27, 0
      %p128 = por %p126, %p127
      %p129 = scmp.ne.s32.totalorder %s117, %s118
      %p130 = scmp.eq.s32.totalorder %s28, 3
      %p131 = por %p129, %p130
      %p133 = scmp.ne.s32.totalorder %s118, %s132
      %p134 = scmp.eq.s32.totalorder %s28, 0
      %p135 = por %p133, %p134
      %s137 = sadd.s32 %s136, 1
      %p140 = scmp.eq.s32.totalorder %s22, 3
      %p141 = scmp.ne.s32.totalorder %s136, %s138
      %p142 = scmp.eq.s32.totalorder %s22, 0
      %p143 = por %p141, %p142
      %p144 = scmp.ne.s32.totalorder %s136, %s138
      %p145 = scmp.eq.s32.totalorder %s27, 3
      %p146 = por %p144, %p145
      %p147 = scmp.ne.s32.totalorder %s138, %s139
      %p148 = scmp.eq.s32.totalorder %s27, 0
      %p149 = por %p147, %p148
      %p150 = scmp.ne.s32.totalorder %s138, %s139
      %p151 = scmp.eq.s32.totalorder %s28, 3
      %p152 = por %p150, %p151
      %p154 = scmp.ne.s32.totalorder %s139, %s153
      %p155 = scmp.eq.s32.totalorder %s28, 0
      %p156 = por %p154, %p155
      %s158 = sadd.s32 %s157, 1
      %p161 = scmp.eq.s32.totalorder %s22, 3
      %p162 = scmp.ne.s32.totalorder %s157, %s159
      %p163 = scmp.eq.s32.totalorder %s22, 0
      %p164 = por %p162, %p163
      %p165 = scmp.ne.s32.totalorder %s157, %s159
      %p166 = scmp.eq.s32.totalorder %s27, 3
      %p167 = por %p165, %p166
      %p168 = scmp.ne.s32.totalorder %s159, %s160
      %p169 = scmp.eq.s32.totalorder %s27, 0
      %p170 = por %p168, %p169
      %p171 = scmp.ne.s32.totalorder %s159, %s160
      %p172 = scmp.eq.s32.totalorder %s28, 3
      %p173 = por %p171, %p172
      %p175 = scmp.ne.s32.totalorder %s160, %s174
      %p176 = scmp.eq.s32.totalorder %s28, 0
      %p177 = por %p175, %p176
      %s179 = sadd.s32 %s178, 1
      %p182 = scmp.eq.s32.totalorder %s22, 3
      %p183 = scmp.ne.s32.totalorder %s178, %s180
      %p184 = scmp.eq.s32.totalorder %s22, 0
      %p185 = por %p183, %p184
      %p186 = scmp.ne.s32.totalorder %s178, %s180
      %p187 = scmp.eq.s32.totalorder %s27, 3
      %p188 = por %p186, %p187
      %p189 = scmp.ne.s32.totalorder %s180, %s181
      %p190 = scmp.eq.s32.totalorder %s27, 0
      %p191 = por %p189, %p190
      %p192 = scmp.ne.s32.totalorder %s180, %s181
      %p193 = scmp.eq.s32.totalorder %s28, 3
      %p194 = por %p192, %p193
      %p196 = scmp.ne.s32.totalorder %s181, %s195
      %p197 = scmp.eq.s32.totalorder %s28, 0
      %p198 = por %p196, %p197
      %s199 = ssub.s32 %s30, %s37
      %p200 = scmp.eq.s32.totalorder %s199, 0
      %s202 = sadd.s32 %s201, 1
      %s203 = scalar_select %p200, %s201, %s202
      %p206 = pneg %p200
      %p207 = scmp.eq.s32.totalorder %s22, 3
      %p208 = por %p206, %p207
      %p209 = scmp.ne.s32.totalorder %s201, %s204
      %p210 = scmp.eq.s32.totalorder %s22, 0
      %p211 = por %p209, %p210
      %p212 = scmp.ne.s32.totalorder %s201, %s204
      %p213 = scmp.eq.s32.totalorder %s27, 3
      %p214 = por %p212, %p213
      %p215 = scmp.ne.s32.totalorder %s204, %s205
      %p216 = scmp.eq.s32.totalorder %s27, 0
      %p217 = por %p215, %p216
      %p218 = scmp.ne.s32.totalorder %s204, %s205
      %p219 = scmp.eq.s32.totalorder %s28, 3
      %p220 = por %p218, %p219
      %p222 = scmp.ne.s32.totalorder %s205, %s221
      %p223 = scmp.eq.s32.totalorder %s28, 0
      %p224 = por %p222, %p223
      %s225 = ssub.s32 %s30, %s37
      %p226 = scmp.eq.s32.totalorder %s225, 0
      %s228 = sadd.s32 %s227, 1
      %s229 = scalar_select %p226, %s227, %s228
      %p232 = pneg %p226
      %p233 = scmp.eq.s32.totalorder %s22, 3
      %p234 = por %p232, %p233
      %p235 = scmp.ne.s32.totalorder %s227, %s230
      %p236 = scmp.eq.s32.totalorder %s22, 0
      %p237 = por %p235, %p236
      %p238 = scmp.ne.s32.totalorder %s227, %s230
      %p239 = scmp.eq.s32.totalorder %s27, 3
      %p240 = por %p238, %p239
      %p241 = scmp.ne.s32.totalorder %s230, %s231
      %p242 = scmp.eq.s32.totalorder %s27, 0
      %p243 = por %p241, %p242
      %p244 = scmp.ne.s32.totalorder %s230, %s231
      %p245 = scmp.eq.s32.totalorder %s28, 3
      %p246 = por %p244, %p245
      %p248 = scmp.ne.s32.totalorder %s231, %s247
      %p249 = scmp.eq.s32.totalorder %s28, 0
      %p250 = por %p248, %p249
      %s251 = ssub.s32 %s30, %s37
      %p252 = scmp.eq.s32.totalorder %s251, 0
      %s254 = sadd.s32 %s253, 1
      %s255 = scalar_select %p252, %s253, %s254
      %p258 = pneg %p252
      %p259 = scmp.eq.s32.totalorder %s22, 3
      %p260 = por %p258, %p259
      %p261 = scmp.ne.s32.totalorder %s253, %s256
      %p262 = scmp.eq.s32.totalorder %s22, 0
      %p263 = por %p261, %p262
      %p264 = scmp.ne.s32.totalorder %s253, %s256
      %p265 = scmp.eq.s32.totalorder %s27, 3
      %p266 = por %p264, %p265
      %p267 = scmp.ne.s32.totalorder %s256, %s257
      %p268 = scmp.eq.s32.totalorder %s27, 0
      %p269 = por %p267, %p268
      %p270 = scmp.ne.s32.totalorder %s256, %s257
      %p271 = scmp.eq.s32.totalorder %s28, 3
      %p272 = por %p270, %p271
      %p274 = scmp.ne.s32.totalorder %s257, %s273
      %p275 = scmp.eq.s32.totalorder %s28, 0
      %p276 = por %p274, %p275
      %s277 = ssub.s32 %s30, %s37
      %p278 = scmp.eq.s32.totalorder %s277, 0
      %s280 = sadd.s32 %s279, 1
      %s281 = scalar_select %p278, %s279, %s280
      %p284 = pneg %p278
      %p285 = scmp.eq.s32.totalorder %s22, 3
      %p286 = por %p284, %p285
      %p287 = scmp.ne.s32.totalorder %s279, %s282
      %p288 = scmp.eq.s32.totalorder %s22, 0
      %p289 = por %p287, %p288
      %p290 = scmp.ne.s32.totalorder %s279, %s282
      %p291 = scmp.eq.s32.totalorder %s27, 3
      %p292 = por %p290, %p291
      %p293 = scmp.ne.s32.totalorder %s282, %s283
      %p294 = scmp.eq.s32.totalorder %s27, 0
      %p295 = por %p293, %p294
      %p296 = scmp.ne.s32.totalorder %s282, %s283
      %p297 = scmp.eq.s32.totalorder %s28, 3
      %p298 = por %p296, %p297
      %p300 = scmp.ne.s32.totalorder %s283, %s299
      %p301 = scmp.eq.s32.totalorder %s28, 0
      %p302 = por %p300, %p301
      %s303 = ssub.s32 %s30, %s37
      %p304 = scmp.eq.s32.totalorder %s303, 0
      %s306 = sadd.s32 %s305, 1
      %s307 = scalar_select %p304, %s305, %s306
      %p310 = pneg %p304
      %p311 = scmp.eq.s32.totalorder %s22, 3
      %p312 = por %p310, %p311
      %p313 = scmp.ne.s32.totalorder %s305, %s308
      %p314 = scmp.eq.s32.totalorder %s22, 0
      %p315 = por %p313, %p314
      %p316 = scmp.ne.s32.totalorder %s305, %s308
      %p317 = scmp.eq.s32.totalorder %s27, 3
      %p318 = por %p316, %p317
      %p319 = scmp.ne.s32.totalorder %s308, %s309
      %p320 = scmp.eq.s32.totalorder %s27, 0
      %p321 = por %p319, %p320
      %p322 = scmp.ne.s32.totalorder %s308, %s309
      %p323 = scmp.eq.s32.totalorder %s28, 3
      %p324 = por %p322, %p323
      %p326 = scmp.ne.s32.totalorder %s309, %s325
      %p327 = scmp.eq.s32.totalorder %s28, 0
      %p328 = por %p326, %p327
      %s329 = ssub.s32 %s30, %s37
      %p330 = scmp.eq.s32.totalorder %s329, 0
      %s332 = sadd.s32 %s331, 1
      %s333 = scalar_select %p330, %s331, %s332
      %p336 = pneg %p330
      %p337 = scmp.eq.s32.totalorder %s22, 3
      %p338 = por %p336, %p337
      %p339 = scmp.ne.s32.totalorder %s331, %s334
      %p340 = scmp.eq.s32.totalorder %s22, 0
      %p341 = por %p339, %p340
      %p342 = scmp.ne.s32.totalorder %s331, %s334
      %p343 = scmp.eq.s32.totalorder %s27, 3
      %p344 = por %p342, %p343
      %p345 = scmp.ne.s32.totalorder %s334, %s335
      %p346 = scmp.eq.s32.totalorder %s27, 0
      %p347 = por %p345, %p346
      %p348 = scmp.ne.s32.totalorder %s334, %s335
      %p349 = scmp.eq.s32.totalorder %s28, 3
      %p350 = por %p348, %p349
      %p352 = scmp.ne.s32.totalorder %s335, %s351
      %p353 = scmp.eq.s32.totalorder %s28, 0
      %p354 = por %p352, %p353
      %s355 = ssub.s32 %s29, %s41
      %p356 = scmp.eq.s32.totalorder %s355, 0
      %s358 = sadd.s32 %s357, 1
      %s359 = scalar_select %p356, %s357, %s358
      %p362 = pneg %p356
      %p363 = scmp.eq.s32.totalorder %s22, 3
      %p364 = por %p362, %p363
      %p365 = scmp.ne.s32.totalorder %s357, %s360
      %p366 = scmp.eq.s32.totalorder %s22, 0
      %p367 = por %p365, %p366
      %p368 = scmp.ne.s32.totalorder %s357, %s360
      %p369 = scmp.eq.s32.totalorder %s27, 3
      %p370 = por %p368, %p369
      %p371 = scmp.ne.s32.totalorder %s360, %s361
      %p372 = scmp.eq.s32.totalorder %s27, 0
      %p373 = por %p371, %p372
      %p374 = scmp.ne.s32.totalorder %s360, %s361
      %p375 = scmp.eq.s32.totalorder %s28, 3
      %p376 = por %p374, %p375
      %p378 = scmp.ne.s32.totalorder %s361, %s377
      %p379 = scmp.eq.s32.totalorder %s28, 0
      %p380 = por %p378, %p379
      %p381 = scmp.le.s32.totalorder 1, %s22
      %p382 = scmp.lt.s32.totalorder %s22, 5
      %p383 = pnand %p381, %p382
      %p384 = pneg %p383
      // Predicated region
      $region9: #{encoding_model_forward.1} parent=5 // pred_check
        _
      $region10: #{encoding_model_forward.1} parent=5 // pred_check_branch
        %386 = sbr.rel (%p383) target = $region12
      $region11: #{encoding_model_forward.1} parent=5 // pred_region
        %s387 = ssub.s32 %s22, 1
        // Predicated region
        $region13: #{encoding_model_forward.1} parent=11 // pred_check
          %p388 = pneg %p107
        $region14: #{encoding_model_forward.1} parent=11 // pred_check_branch
          %390 = sbr.rel (%p388) target = $region16
        $region15: #{encoding_model_forward.1} parent=11 // pred_region
          _
        $region16: #{encoding_model_forward.1} parent=11 // pred_fallthru
          _
        // Predicated region
        $region17: #{encoding_model_forward.1} parent=11 // pred_check
          %p391 = pneg %p128
        $region18: #{encoding_model_forward.1} parent=11 // pred_check_branch
          %393 = sbr.rel (%p391) target = $region20
        $region19: #{encoding_model_forward.1} parent=11 // pred_region
          _
        $region20: #{encoding_model_forward.1} parent=11 // pred_fallthru
          _
        // Predicated region
        $region21: #{encoding_model_forward.1} parent=11 // pred_check
          %p394 = pneg %p149
        $region22: #{encoding_model_forward.1} parent=11 // pred_check_branch
          %396 = sbr.rel (%p394) target = $region24
        $region23: #{encoding_model_forward.1} parent=11 // pred_region
          _
        $region24: #{encoding_model_forward.1} parent=11 // pred_fallthru
          _
        // Predicated region
        $region25: #{encoding_model_forward.1} parent=11 // pred_check
          %p397 = pneg %p170
        $region26: #{encoding_model_forward.1} parent=11 // pred_check_branch
          %399 = sbr.rel (%p397) target = $region28
        $region27: #{encoding_model_forward.1} parent=11 // pred_region
          _
        $region28: #{encoding_model_forward.1} parent=11 // pred_fallthru
          _
        // Predicated region
        $region29: #{encoding_model_forward.1} parent=11 // pred_check
          %p400 = pneg %p191
        $region30: #{encoding_model_forward.1} parent=11 // pred_check_branch
          %402 = sbr.rel (%p400) target = $region32
        $region31: #{encoding_model_forward.1} parent=11 // pred_region
          _
        $region32: #{encoding_model_forward.1} parent=11 // pred_fallthru
          _
      $region12: #{encoding_model_forward.1} parent=5 // pred_fallthru
        _
      %p403 = scmp.lt.s32.totalorder %s22, 4
      // Predicated region
      $region33: #{encoding_model_forward.1} parent=5 // pred_check
        %p404 = pneg %p403
      $region34: #{encoding_model_forward.1} parent=5 // pred_check_branch
        %406 = sbr.rel (%p404) target = $region36
      $region35: #{encoding_model_forward.1} parent=5 // pred_region
        // Predicated region
        $region37: #{encoding_model_forward.1} parent=35 // pred_check
          %p407 = pneg %p54
        $region38: #{encoding_model_forward.1} parent=35 // pred_check_branch
          %409 = sbr.rel (%p407) target = $region40
        $region39: #{encoding_model_forward.1} parent=35 // pred_region
          %p410 = scmp.lt.s32.totalorder %s29, 1
          %s411 = scalar_select %p410, %s29, 1
          %s412 = smul.addr %s411, 8
          %s413 = scalar_lea.vmem %s0, %s412
        $region40: #{encoding_model_forward.1} parent=35 // pred_fallthru
          _
        // Predicated region
        $region41: #{encoding_model_forward.1} parent=35 // pred_check
          %p414 = pneg %p80
        $region42: #{encoding_model_forward.1} parent=35 // pred_check_branch
          %416 = sbr.rel (%p414) target = $region44
        $region43: #{encoding_model_forward.1} parent=35 // pred_region
          %p417 = scmp.lt.s32.totalorder %s29, 1
          %s418 = scalar_select %p417, %s29, 1
          %s419 = scalar_lea.vmem %s1, %s418
        $region44: #{encoding_model_forward.1} parent=35 // pred_fallthru
          _
        // Predicated region
        $region45: #{encoding_model_forward.1} parent=35 // pred_check
          %p420 = pneg %p211
        $region46: #{encoding_model_forward.1} parent=35 // pred_check_branch
          %422 = sbr.rel (%p420) target = $region48
        $region47: #{encoding_model_forward.1} parent=35 // pred_region
          %p423 = scmp.lt.s32.totalorder %s30, 1
          %s424 = scalar_select %p423, %s30, 1
          %s425 = scalar_lea.vmem %s7, %s424
        $region48: #{encoding_model_forward.1} parent=35 // pred_fallthru
          _
        // Predicated region
        $region49: #{encoding_model_forward.1} parent=35 // pred_check
          %p426 = pneg %p237
        $region50: #{encoding_model_forward.1} parent=35 // pred_check_branch
          %428 = sbr.rel (%p426) target = $region52
        $region51: #{encoding_model_forward.1} parent=35 // pred_region
          %p429 = scmp.lt.s32.totalorder %s30, 1
          %s430 = scalar_select %p429, %s30, 1
          %s431 = scalar_lea.vmem %s8, %s430
        $region52: #{encoding_model_forward.1} parent=35 // pred_fallthru
          _
        // Predicated region
        $region53: #{encoding_model_forward.1} parent=35 // pred_check
          %p432 = pneg %p263
        $region54: #{encoding_model_forward.1} parent=35 // pred_check_branch
          %434 = sbr.rel (%p432) target = $region56
        $region55: #{encoding_model_forward.1} parent=35 // pred_region
          %p435 = scmp.lt.s32.totalorder %s30, 1
          %s436 = scalar_select %p435, %s30, 1
          %s437 = smul.addr %s436, 4
          %s438 = smul.addr %s437, 4
          %s439 = scalar_lea.vmem %s9, %s438
        $region56: #{encoding_model_forward.1} parent=35 // pred_fallthru
          _
        // Predicated region
        $region57: #{encoding_model_forward.1} parent=35 // pred_check
          %p440 = pneg %p289
        $region58: #{encoding_model_forward.1} parent=35 // pred_check_branch
          %442 = sbr.rel (%p440) target = $region60
        $region59: #{encoding_model_forward.1} parent=35 // pred_region
          %p443 = scmp.lt.s32.totalorder %s30, 1
          %s444 = scalar_select %p443, %s30, 1
          %s445 = smul.addr %s444, 4
          %s446 = smul.addr %s445, 4
          %s447 = scalar_lea.vmem %s10, %s446
        $region60: #{encoding_model_forward.1} parent=35 // pred_fallthru
          _
        // Predicated region
        $region61: #{encoding_model_forward.1} parent=35 // pred_check
          %p448 = pneg %p315
        $region62: #{encoding_model_forward.1} parent=35 // pred_check_branch
          %450 = sbr.rel (%p448) target = $region64
        $region63: #{encoding_model_forward.1} parent=35 // pred_region
          %p451 = scmp.lt.s32.totalorder %s30, 1
          %s452 = scalar_select %p451, %s30, 1
          %s453 = smul.addr %s452, 4
          %s454 = smul.addr %s453, 4
          %s455 = scalar_lea.vmem %s11, %s454
        $region64: #{encoding_model_forward.1} parent=35 // pred_fallthru
          _
        // Predicated region
        $region65: #{encoding_model_forward.1} parent=35 // pred_check
          %p456 = pneg %p341
        $region66: #{encoding_model_forward.1} parent=35 // pred_check_branch
          %458 = sbr.rel (%p456) target = $region68
        $region67: #{encoding_model_forward.1} parent=35 // pred_region
          %p459 = scmp.lt.s32.totalorder %s30, 1
          %s460 = scalar_select %p459, %s30, 1
          %s461 = smul.addr %s460, 8
          %s462 = smul.addr %s461, 4
          %s463 = scalar_lea.vmem %s12, %s462
        $region68: #{encoding_model_forward.1} parent=35 // pred_fallthru
          _
      $region36: #{encoding_model_forward.1} parent=5 // pred_fallthru
        _
      %p464 = scmp.le.s32.totalorder 1, %s22
      %p465 = scmp.lt.s32.totalorder %s22, 5
      %p466 = pnand %p464, %p465
      %p467 = pneg %p466
      // Predicated region
      $region69: #{encoding_model_forward.1} parent=5 // pred_check
        _
      $region70: #{encoding_model_forward.1} parent=5 // pred_check_branch
        %469 = sbr.rel (%p466) target = $region72
      $region71: #{encoding_model_forward.1} parent=5 // pred_region
        %s470 = ssub.s32 %s22, 1
        %p471 = scmp.lt.s32.totalorder %s31, 1
        %s472 = scalar_select %p471, %s31, 1
        %s473 = smul.addr %s472, 8
        %s474 = scalar_lea.vmem %s0, %s473
        %p475 = pneg %p60
        %p476 = pneg %p57
        %p477 = scmp.lt.s32.totalorder %s31, 1
        %s478 = scalar_select %p477, %s31, 1
        %s479 = scalar_lea.vmem %s1, %s478
        %p480 = pneg %p86
        %p481 = pneg %p83
        %p482 = pneg %p107
        %p483 = pneg %p104
        %p484 = pneg %p128
        %p485 = pneg %p125
        %p486 = pneg %p149
        %p487 = pneg %p146
        %p488 = pneg %p170
        %p489 = pneg %p167
        %p490 = pneg %p191
        %p491 = pneg %p188
        %p492 = scmp.lt.s32.totalorder %s32, 1
        %s493 = scalar_select %p492, %s32, 1
        %s494 = scalar_lea.vmem %s7, %s493
        %p495 = pneg %p217
        %p496 = pneg %p214
        %p497 = scmp.lt.s32.totalorder %s32, 1
        %s498 = scalar_select %p497, %s32, 1
        %s499 = scalar_lea.vmem %s8, %s498
        %p500 = pneg %p243
        %p501 = pneg %p240
        %p502 = scmp.lt.s32.totalorder %s32, 1
        %s503 = scalar_select %p502, %s32, 1
        %s504 = smul.addr %s503, 4
        %s505 = smul.addr %s504, 4
        %s506 = scalar_lea.vmem %s9, %s505
        %p507 = pneg %p269
        %p508 = pneg %p266
        %p509 = scmp.lt.s32.totalorder %s32, 1
        %s510 = scalar_select %p509, %s32, 1
        %s511 = smul.addr %s510, 4
        %s512 = smul.addr %s511, 4
        %s513 = scalar_lea.vmem %s10, %s512
        %p514 = pneg %p295
        %p515 = pneg %p292
        %p516 = scmp.lt.s32.totalorder %s32, 1
        %s517 = scalar_select %p516, %s32, 1
        %s518 = smul.addr %s517, 4
        %s519 = smul.addr %s518, 4
        %s520 = scalar_lea.vmem %s11, %s519
        %p521 = pneg %p321
        %p522 = pneg %p318
        %p523 = scmp.lt.s32.totalorder %s32, 1
        %s524 = scalar_select %p523, %s32, 1
        %s525 = smul.addr %s524, 8
        %s526 = smul.addr %s525, 4
        %s527 = scalar_lea.vmem %s12, %s526
        %p528 = pneg %p347
        %p529 = pneg %p344
        %p530 = pneg %p373
        %p531 = pneg %p370
        %s532 = sand.u32 %s360, 1
        %s533 = scalar_lea.sflag [#allocation4], %s532
        %s534 = sand.u32 %s360, 1
        %s535 = scalar_lea.vmem [#allocation3], %s534
        %p536 = scmp.lt.s32.totalorder %s31, 1
        %s537 = scalar_select %p536, %s31, 1
        %s538 = smul.addr %s537, 8
        %s539 = scalar_lea.vmem %s0, %s538
        %p540 = scmp.lt.s32.totalorder %s31, 1
        %s541 = scalar_select %p540, %s31, 1
        %s542 = scalar_lea.vmem %s1, %s541
        %p543 = scmp.lt.s32.totalorder %s32, 1
        %s544 = scalar_select %p543, %s32, 1
        %s545 = scalar_lea.vmem %s7, %s544
        %p546 = scmp.lt.s32.totalorder %s32, 1
        %s547 = scalar_select %p546, %s32, 1
        %s548 = scalar_lea.vmem %s8, %s547
        %p549 = scmp.lt.s32.totalorder %s32, 1
        %s550 = scalar_select %p549, %s32, 1
        %s551 = smul.addr %s550, 4
        %s552 = smul.addr %s551, 4
        %s553 = scalar_lea.vmem %s9, %s552
        %p554 = scmp.lt.s32.totalorder %s32, 1
        %s555 = scalar_select %p554, %s32, 1
        %s556 = smul.addr %s555, 4
        %s557 = smul.addr %s556, 4
        %s558 = scalar_lea.vmem %s10, %s557
        %p559 = scmp.lt.s32.totalorder %s32, 1
        %s560 = scalar_select %p559, %s32, 1
        %s561 = smul.addr %s560, 4
        %s562 = smul.addr %s561, 4
        %s563 = scalar_lea.vmem %s11, %s562
        %p564 = scmp.lt.s32.totalorder %s32, 1
        %s565 = scalar_select %p564, %s32, 1
        %s566 = smul.addr %s565, 8
        %s567 = smul.addr %s566, 4
        %s568 = scalar_lea.vmem %s12, %s567
        %p570 = scmp.eq.s32.totalorder %s32, 0
        // Predicated region
        $region73: #{encoding_model_forward.1} parent=71 // pred_check
          %p571 = pneg %p570
        $region74: #{encoding_model_forward.1} parent=71 // pred_check_branch
          %573 = sbr.rel (%p571) target = $region76
        $region75: #{encoding_model_forward.1} parent=71 // pred_region
          %v574 = vld [vmem:[%s539] sm:$0xff]
          %v575 = vlaneseq
          %v576 = vand.u32 %v575, 127
          %577 = vset.pattern.permute.xlu0 0
          %578 = vperm.xlu0 %577, %v574
          %v579 = vpop.permute.xlu0 %578
          %vm580 = vcmp.eq.s32.totalorder %v576, %v579
          %v581 = vsel %vm580, 1, 0
          %v582 = vcvt.s32.f32 %v581
          %v583 = vld [vmem:[%s5] sm:$0xff]
          %v584 = vld [vmem:[%s5 + $0x8] sm:$0xff]
          %v585 = vld [vmem:[%s5 + $0x10] sm:$0xff]
          %v586 = vld [vmem:[%s5 + $0x18] sm:$0xff]
          %v587 = vld [vmem:[%s5 + $0x20] sm:$0xff]
          %v588 = vld [vmem:[%s5 + $0x28] sm:$0xff]
          %v589 = vld [vmem:[%s5 + $0x30] sm:$0xff]
          %v590 = vld [vmem:[%s5 + $0x38] sm:$0xff]
          %v591 = vld [vmem:[%s5 + $0x40] sm:$0xff]
          %v592 = vld [vmem:[%s5 + $0x48] sm:$0xff]
          %v593 = vld [vmem:[%s5 + $0x50] sm:$0xff]
          %v594 = vld [vmem:[%s5 + $0x58] sm:$0xff]
          %v595 = vld [vmem:[%s5 + $0x60] sm:$0xff]
          %v596 = vld [vmem:[%s5 + $0x68] sm:$0xff]
          %v597 = vld [vmem:[%s5 + $0x70] sm:$0xff]
          %v598 = vld [vmem:[%s5 + $0x78] sm:$0xff]
          %599 = vmatpush.msra.mxu0 %v598
          %600 = vmatpush.msra.mxu0 %v597
          %601 = vmatpush.msra.mxu0 %v596
          %602 = vmatpush.msra.mxu0 %v595
          %603 = vmatpush.msra.mxu0 %v594
          %604 = vmatpush.msra.mxu0 %v593
          %605 = vmatpush.msra.mxu0 %v592
          %606 = vmatpush.msra.mxu0 %v591
          %607 = vmatpush.msra.mxu0 %v590
          %608 = vmatpush.msra.mxu0 %v589
          %609 = vmatpush.msra.mxu0 %v588
          %610 = vmatpush.msra.mxu0 %v587
          %611 = vmatpush.msra.mxu0 %v586
          %612 = vmatpush.msra.mxu0 %v585
          %613 = vmatpush.msra.mxu0 %v584
          %614 = vmatpush.msra.mxu0 %v583
          %615 = vmatmul.f32.gmra.mxu0 %v582
          %v616 = vpop.f32.mrf.mxu0
          %v617 = vadd.f32 0.0, %v616
          %618 = vdwg.mxu0
          %vm619 = vcmask 261120
          %620 = vst.msk [vmem:[#allocation2] sm:$0xff] %vm619, %v617
        $region76: #{encoding_model_forward.1} parent=71 // pred_fallthru
          _
        %v621 = vld [vmem:[%s542] sm:$0x1]
        %v622 = vsub.f32 %v621, 1.0
        %v623 = vmul.f32 %v622, 1e+09
        %v624 = vld [vmem:[%s2] sm:$0xff]
        %v625 = vld [vmem:[%s3] sm:$0xff]
        %v626 = vld [vmem:[%s4] sm:$0xff]
        %v627 = vld [vmem:[%s4 + $0x8] sm:$0xff]
        %v628 = vld [vmem:[%s4 + $0x10] sm:$0xff]
        %v629 = vld [vmem:[%s4 + $0x18] sm:$0xff]
        %v630 = vld [vmem:[#allocation2] sm:$0xff]
        %v631 = vld [vmem:[%s545] sm:$0x1]
        %v632 = vmul.f32 %v630, %v630
        %vm633 = vcmask 261120
        %v634 = vsel %vm633, %v632, 0.0
        %635 = vadd.xlane.f32.xlu0 %v634
        %v636 = vpop.xlane.xlu0 %635
        %v637 = vrcp.pop 32.0
        %v638 = vmul.f32 32.0, %v637
        %v639 = vsub.f32 1.0, %v638
        %v640 = vmul.f32 %v637, %v639
        %v641 = vadd.f32 %v637, %v640
        %vm642 = vweird.f32 %v637
        %v643 = vsel %vm642, %v637, %v641
        %v644 = vmul.f32 %v636, %v643
        %v645 = vadd.f32 %v644, 1e-05
        %v646 = vrsqrt.pop %v645
        %v647 = vmul.f32 %v646, %v645
        %v648 = vmul.f32 %v647, %v646
        %v649 = vmul.f32 0.5, %v648
        %v650 = vsub.f32 1.5, %v649
        %v651 = vmul.f32 %v646, %v650
        %vm652 = vweird.f32 %v645
        %vm653 = vweird.f32 %v646
        %vm654 = vmor %vm652, %vm653
        %v655 = vsel %vm654, %v646, %v651
        %v656 = vmul.f32 %v630, %v655
        %v658 = vperm.slane %v631, 0
        %v660 = vmul.f32 %v656, %v658
        %v661 = vld [vmem:[%s553] sm:$0xf]
        %v662 = vld [vmem:[%s553 + $0x4] sm:$0xf]
        %v663 = vld [vmem:[%s553 + $0x8] sm:$0xf]
        %v664 = vld [vmem:[%s553 + $0xc] sm:$0xf]
        %v665 = vpack.c.bf16 %v660, %v660
        %v670 = vunpack.c.l.b16 %v661
        %v671 = vunpack.c.l.b16 %v662
        %v672 = vunpack.c.l.b16 %v663
        %v673 = vunpack.c.l.b16 %v664
        %v674 = vpack.c.b16 %v671, %v670
        %v675 = vpack.c.b16 %v673, %v672
        %v679 = vsel %vm633, %v665, 0
        %681 = vmatpush.bf16.msra.mxu0 0
        %682 = vmatpush.bf16.msra.mxu0 0
        %683 = vmatpush.bf16.msra.mxu0 0
        %684 = vmatpush.bf16.msra.mxu0 0
        %685 = vmatpush.bf16.msra.mxu0 0
        %686 = vmatpush.bf16.msra.mxu0 0
        %687 = vmatpush.bf16.msra.mxu0 %v675
        %688 = vmatpush.bf16.msra.mxu0 %v674
        %689 = vmatmul.bf16.gmra.mxu0 %v679
        %v690 = vpop.f32.mrf.mxu0
        %v691 = vadd.f32 0.0, %v690
        %v692 = vpop.f32.mrf.mxu0
        %693 = vdwg.mxu0
        %v694 = vmul.f32 %v691, %v624
        %v696 = vsel %vm633, %v691, 0
        %698 = vmatpush.msra.mxu0 0.0
        %699 = vmatpush.msra.mxu0 0.0
        %700 = vmatpush.msra.mxu0 0.0
        %701 = vmatpush.msra.mxu0 0.0
        %702 = vmatpush.msra.mxu0 0.0
        %703 = vmatpush.msra.mxu0 0.0
        %704 = vmatpush.msra.mxu0 0.0
        %705 = vmatpush.msra.mxu0 0.0
        %706 = vmatpush.msra.mxu0 0.0
        %707 = vmatpush.msra.mxu0 0.0
        %708 = vmatpush.msra.mxu0 0.0
        %709 = vmatpush.msra.mxu0 0.0
        %710 = vmatpush.msra.mxu0 %v629
        %711 = vmatpush.msra.mxu0 %v628
        %712 = vmatpush.msra.mxu0 %v627
        %713 = vmatpush.msra.mxu0 %v626
        %714 = vmatmul.f32.gmra.mxu0 %v696
        %v715 = vpop.f32.mrf.mxu0
        %v716 = vadd.f32 0.0, %v715
        %717 = vdwg.mxu0
        %v718 = vmul.f32 %v716, %v625
        %v719 = vadd.f32 %v694, %v718
        %721 = vrot.lane.b32.xlu0 %v624, 32
        %v722 = vpop.permute.xlu0 %721
        %v724 = vmul.f32 %v691, %v722
        %725 = vrot.lane.b32.xlu0 %v691, 96
        %v726 = vpop.permute.xlu0 %725
        %v727 = vsel %vm633, %v726, 0
        %729 = vmatpush.msra.mxu0 0.0
        %730 = vmatpush.msra.mxu0 0.0
        %731 = vmatpush.msra.mxu0 0.0
        %732 = vmatpush.msra.mxu0 0.0
        %733 = vmatpush.msra.mxu0 0.0
        %734 = vmatpush.msra.mxu0 0.0
        %735 = vmatpush.msra.mxu0 0.0
        %736 = vmatpush.msra.mxu0 0.0
        %737 = vmatpush.msra.mxu0 0.0
        %738 = vmatpush.msra.mxu0 0.0
        %739 = vmatpush.msra.mxu0 0.0
        %740 = vmatpush.msra.mxu0 0.0
        %741 = vmatpush.msra.mxu0 %v629
        %742 = vmatpush.msra.mxu0 %v628
        %743 = vmatpush.msra.mxu0 %v627
        %744 = vmatpush.msra.mxu0 %v626
        %745 = vmatmul.f32.gmra.mxu0 %v727
        %v746 = vpop.f32.mrf.mxu0
        %v747 = vadd.f32 0.0, %v746
        %748 = vdwg.mxu0
        %v749 = vmul.f32 %v747, %v625
        %751 = vrot.lane.b32.xlu0 %v749, 32
        %v752 = vpop.permute.xlu0 %751
        %v754 = vadd.f32 %v724, %v752
        %v755 = vld [vmem:[%s558] sm:$0xf]
        %v756 = vld [vmem:[%s558 + $0x4] sm:$0xf]
        %v757 = vld [vmem:[%s558 + $0x8] sm:$0xf]
        %v758 = vld [vmem:[%s558 + $0xc] sm:$0xf]
        %760 = vrot.lane.b32.xlu0 %v754, 96
        %v761 = vpop.permute.xlu0 %760
        %vm762 = vcmask 64512
        %v764 = vsel %vm762, %v719, 0
        %v766 = vsel %vm762, %v761, 0
        %768 = vmatpush.xpose.msra.mxu0 0.0
        %769 = vmatpush.xpose.msra.mxu0 0.0
        %770 = vmatpush.xpose.msra.mxu0 0.0
        %771 = vmatpush.xpose.msra.mxu0 0.0
        %772 = vmatpush.xpose.msra.mxu0 0.0
        %773 = vmatpush.xpose.msra.mxu0 0.0
        %774 = vmatpush.xpose.msra.mxu0 0.0
        %775 = vmatpush.xpose.msra.mxu0 0.0
        %776 = vmatpush.xpose.msra.mxu0 0.0
        %777 = vmatpush.xpose.msra.mxu0 0.0
        %778 = vmatpush.xpose.msra.mxu0 0.0
        %779 = vmatpush.xpose.msra.mxu0 0.0
        %780 = vmatpush.xpose.msra.mxu0 0.0
        %781 = vmatpush.xpose.msra.mxu0 0.0
        %782 = vmatpush.xpose.msra.mxu0 0.0
        %783 = vmatpush.xpose.msra.mxu0 %v766
        %784 = vmatmul.f32.gmra.mxu0 %v764
        %v785 = vpop.f32.mrf.mxu0
        %v786 = vadd.f32 0.0, %v785
        %787 = vdwg.mxu0
        %v788 = vmul.f32 %v786, 0.35355338
        %v790 = vperm.slane %v623, 0
        %v792 = vadd.f32 %v788, %v790
        %v793 = vsel %vm762, %v792, -inf
        %794 = vmax.xlane.f32.xlu0 %v793
        %v795 = vpop.xlane.xlu0 %794
        %v796 = vsub.f32 %v792, %v795
        %v797 = vmul.f32 %v796, 1.442695
        %v798 = vpow.pop %v797
        %v799 = vsel %vm762, %v798, 0.0
        %800 = vadd.xlane.f32.xlu0 %v799
        %v801 = vpop.xlane.xlu0 %800
        %v802 = vrcp.pop %v801
        %v803 = vmul.f32 %v798, %v802
        %804 = vrot.lane.b32.xlu0 %v691, 64
        %v805 = vpop.permute.xlu0 %804
        %v808 = vsel %vm762, %v803, 0
        %810 = vmatpush.msra.mxu0 0.0
        %811 = vmatpush.msra.mxu0 0.0
        %812 = vmatpush.msra.mxu0 0.0
        %813 = vmatpush.msra.mxu0 0.0
        %814 = vmatpush.msra.mxu0 0.0
        %815 = vmatpush.msra.mxu0 0.0
        %816 = vmatpush.msra.mxu0 0.0
        %817 = vmatpush.msra.mxu0 0.0
        %818 = vmatpush.msra.mxu0 0.0
        %819 = vmatpush.msra.mxu0 0.0
        %820 = vmatpush.msra.mxu0 0.0
        %821 = vmatpush.msra.mxu0 0.0
        %822 = vmatpush.msra.mxu0 0.0
        %823 = vmatpush.msra.mxu0 0.0
        %824 = vmatpush.msra.mxu0 0.0
        %825 = vmatpush.msra.mxu0 %v805
        %826 = vmatmul.f32.gmra.mxu0 %v808
        %v827 = vpop.f32.mrf.mxu0
        %v828 = vadd.f32 0.0, %v827
        %829 = vdwg.mxu0
        %v830 = vpack.c.bf16 %v828, %v828
        %831 = vrot.lane.b32.xlu0 %v719, 120
        %v832 = vpop.permute.xlu0 %831
        %833 = vrot.lane.b32.xlu0 %v754, 88
        %v834 = vpop.permute.xlu0 %833
        %v835 = vsel %vm762, %v832, 0
        %v837 = vsel %vm762, %v834, 0
        %839 = vmatpush.xpose.msra.mxu0 0.0
        %840 = vmatpush.xpose.msra.mxu0 0.0
        %841 = vmatpush.xpose.msra.mxu0 0.0
        %842 = vmatpush.xpose.msra.mxu0 0.0
        %843 = vmatpush.xpose.msra.mxu0 0.0
        %844 = vmatpush.xpose.msra.mxu0 0.0
        %845 = vmatpush.xpose.msra.mxu0 0.0
        %846 = vmatpush.xpose.msra.mxu0 0.0
        %847 = vmatpush.xpose.msra.mxu0 0.0
        %848 = vmatpush.xpose.msra.mxu0 0.0
        %849 = vmatpush.xpose.msra.mxu0 0.0
        %850 = vmatpush.xpose.msra.mxu0 0.0
        %851 = vmatpush.xpose.msra.mxu0 0.0
        %852 = vmatpush.xpose.msra.mxu0 0.0
        %853 = vmatpush.xpose.msra.mxu0 0.0
        %854 = vmatpush.xpose.msra.mxu0 %v837
        %855 = vmatmul.f32.gmra.mxu0 %v835
        %v856 = vpop.f32.mrf.mxu0
        %v857 = vadd.f32 0.0, %v856
        %858 = vdwg.mxu0
        %v859 = vmul.f32 %v857, 0.35355338
        %v860 = vadd.f32 %v859, %v790
        %v861 = vsel %vm762, %v860, -inf
        %862 = vmax.xlane.f32.xlu0 %v861
        %v863 = vpop.xlane.xlu0 %862
        %v864 = vsub.f32 %v860, %v863
        %v865 = vmul.f32 %v864, 1.442695
        %v866 = vpow.pop %v865
        %v867 = vsel %vm762, %v866, 0.0
        %868 = vadd.xlane.f32.xlu0 %v867
        %v869 = vpop.xlane.xlu0 %868
        %v870 = vrcp.pop %v869
        %v871 = vmul.f32 %v866, %v870
        %872 = vrot.lane.b32.xlu0 %v691, 56
        %v873 = vpop.permute.xlu0 %872
        %v876 = vsel %vm762, %v871, 0
        %878 = vmatpush.msra.mxu0 0.0
        %879 = vmatpush.msra.mxu0 0.0
        %880 = vmatpush.msra.mxu0 0.0
        %881 = vmatpush.msra.mxu0 0.0
        %882 = vmatpush.msra.mxu0 0.0
        %883 = vmatpush.msra.mxu0 0.0
        %884 = vmatpush.msra.mxu0 0.0
        %885 = vmatpush.msra.mxu0 0.0
        %886 = vmatpush.msra.mxu0 0.0
        %887 = vmatpush.msra.mxu0 0.0
        %888 = vmatpush.msra.mxu0 0.0
        %889 = vmatpush.msra.mxu0 0.0
        %890 = vmatpush.msra.mxu0 0.0
        %891 = vmatpush.msra.mxu0 0.0
        %892 = vmatpush.msra.mxu0 0.0
        %893 = vmatpush.msra.mxu0 %v873
        %894 = vmatmul.f32.gmra.mxu0 %v876
        %v895 = vpop.f32.mrf.mxu0
        %v896 = vadd.f32 0.0, %v895
        %897 = vdwg.mxu0
        %v898 = vpack.c.bf16 %v896, %v896
        %v900 = vsel %vm762, %v898, 0
        %vm902 = vcmask 1043456
        %v904 = vsel %vm902, %v756, 0
        %906 = vmatpush.bf16.msra.mxu0 0
        %907 = vmatpush.bf16.msra.mxu0 0
        %908 = vmatpush.bf16.msra.mxu0 0
        %909 = vmatpush.bf16.msra.mxu0 0
        %910 = vmatpush.bf16.msra.mxu0 0
        %911 = vmatpush.bf16.msra.mxu0 0
        %912 = vmatpush.bf16.msra.mxu0 0
        %913 = vmatpush.bf16.msra.mxu0 %v904
        %914 = vmatmul.bf16.gmra.mxu0 %v900
        %v915 = vpop.f32.mrf.mxu0
        %v916 = vadd.f32 0.0, %v915
        %v917 = vpop.f32.mrf.mxu0
        %918 = vdwg.mxu0
        %v920 = vsel %vm762, %v830, 0
        %v923 = vsel %vm902, %v755, 0
        %925 = vmatpush.bf16.msra.mxu0 0
        %926 = vmatpush.bf16.msra.mxu0 0
        %927 = vmatpush.bf16.msra.mxu0 0
        %928 = vmatpush.bf16.msra.mxu0 0
        %929 = vmatpush.bf16.msra.mxu0 0
        %930 = vmatpush.bf16.msra.mxu0 0
        %931 = vmatpush.bf16.msra.mxu0 0
        %932 = vmatpush.bf16.msra.mxu0 %v923
        %933 = vmatmul.bf16.gmra.mxu0 %v920
        %v934 = vpop.f32.mrf.mxu0
        %v935 = vadd.f32 %v916, %v934
        %v936 = vpop.f32.mrf.mxu0
        %937 = vdwg.mxu0
        %938 = vrot.lane.b32.xlu0 %v719, 112
        %v939 = vpop.permute.xlu0 %938
        %940 = vrot.lane.b32.xlu0 %v754, 80
        %v941 = vpop.permute.xlu0 %940
        %v942 = vsel %vm762, %v939, 0
        %v944 = vsel %vm762, %v941, 0
        %946 = vmatpush.xpose.msra.mxu0 0.0
        %947 = vmatpush.xpose.msra.mxu0 0.0
        %948 = vmatpush.xpose.msra.mxu0 0.0
        %949 = vmatpush.xpose.msra.mxu0 0.0
        %950 = vmatpush.xpose.msra.mxu0 0.0
        %951 = vmatpush.xpose.msra.mxu0 0.0
        %952 = vmatpush.xpose.msra.mxu0 0.0
        %953 = vmatpush.xpose.msra.mxu0 0.0
        %954 = vmatpush.xpose.msra.mxu0 0.0
        %955 = vmatpush.xpose.msra.mxu0 0.0
        %956 = vmatpush.xpose.msra.mxu0 0.0
        %957 = vmatpush.xpose.msra.mxu0 0.0
        %958 = vmatpush.xpose.msra.mxu0 0.0
        %959 = vmatpush.xpose.msra.mxu0 0.0
        %960 = vmatpush.xpose.msra.mxu0 0.0
        %961 = vmatpush.xpose.msra.mxu0 %v944
        %962 = vmatmul.f32.gmra.mxu0 %v942
        %v963 = vpop.f32.mrf.mxu0
        %v964 = vadd.f32 0.0, %v963
        %965 = vdwg.mxu0
        %v966 = vmul.f32 %v964, 0.35355338
        %v967 = vadd.f32 %v966, %v790
        %v968 = vsel %vm762, %v967, -inf
        %969 = vmax.xlane.f32.xlu0 %v968
        %v970 = vpop.xlane.xlu0 %969
        %v971 = vsub.f32 %v967, %v970
        %v972 = vmul.f32 %v971, 1.442695
        %v973 = vpow.pop %v972
        %v974 = vsel %vm762, %v973, 0.0
        %975 = vadd.xlane.f32.xlu0 %v974
        %v976 = vpop.xlane.xlu0 %975
        %v977 = vrcp.pop %v976
        %v978 = vmul.f32 %v973, %v977
        %979 = vrot.lane.b32.xlu0 %v691, 48
        %v980 = vpop.permute.xlu0 %979
        %v983 = vsel %vm762, %v978, 0
        %985 = vmatpush.msra.mxu0 0.0
        %986 = vmatpush.msra.mxu0 0.0
        %987 = vmatpush.msra.mxu0 0.0
        %988 = vmatpush.msra.mxu0 0.0
        %989 = vmatpush.msra.mxu0 0.0
        %990 = vmatpush.msra.mxu0 0.0
        %991 = vmatpush.msra.mxu0 0.0
        %992 = vmatpush.msra.mxu0 0.0
        %993 = vmatpush.msra.mxu0 0.0
        %994 = vmatpush.msra.mxu0 0.0
        %995 = vmatpush.msra.mxu0 0.0
        %996 = vmatpush.msra.mxu0 0.0
        %997 = vmatpush.msra.mxu0 0.0
        %998 = vmatpush.msra.mxu0 0.0
        %999 = vmatpush.msra.mxu0 0.0
        %1000 = vmatpush.msra.mxu0 %v980
        %1001 = vmatmul.f32.gmra.mxu0 %v983
        %v1002 = vpop.f32.mrf.mxu0
        %v1003 = vadd.f32 0.0, %v1002
        %1004 = vdwg.mxu0
        %v1005 = vpack.c.bf16 %v1003, %v1003
        %v1007 = vsel %vm762, %v1005, 0
        %v1010 = vsel %vm902, %v757, 0
        %1012 = vmatpush.bf16.msra.mxu0 0
        %1013 = vmatpush.bf16.msra.mxu0 0
        %1014 = vmatpush.bf16.msra.mxu0 0
        %1015 = vmatpush.bf16.msra.mxu0 0
        %1016 = vmatpush.bf16.msra.mxu0 0
        %1017 = vmatpush.bf16.msra.mxu0 0
        %1018 = vmatpush.bf16.msra.mxu0 0
        %1019 = vmatpush.bf16.msra.mxu0 %v1010
        %1020 = vmatmul.bf16.gmra.mxu0 %v1007
        %v1021 = vpop.f32.mrf.mxu0
        %v1022 = vadd.f32 0.0, %v1021
        %v1023 = vpop.f32.mrf.mxu0
        %1024 = vdwg.mxu0
        %v1025 = vadd.f32 %v935, %v1022
        %1026 = vrot.lane.b32.xlu0 %v719, 104
        %v1027 = vpop.permute.xlu0 %1026
        %1028 = vrot.lane.b32.xlu0 %v754, 72
        %v1029 = vpop.permute.xlu0 %1028
        %v1030 = vsel %vm762, %v1027, 0
        %v1032 = vsel %vm762, %v1029, 0
        %1034 = vmatpush.xpose.msra.mxu0 0.0
        %1035 = vmatpush.xpose.msra.mxu0 0.0
        %1036 = vmatpush.xpose.msra.mxu0 0.0
        %1037 = vmatpush.xpose.msra.mxu0 0.0
        %1038 = vmatpush.xpose.msra.mxu0 0.0
        %1039 = vmatpush.xpose.msra.mxu0 0.0
        %1040 = vmatpush.xpose.msra.mxu0 0.0
        %1041 = vmatpush.xpose.msra.mxu0 0.0
        %1042 = vmatpush.xpose.msra.mxu0 0.0
        %1043 = vmatpush.xpose.msra.mxu0 0.0
        %1044 = vmatpush.xpose.msra.mxu0 0.0
        %1045 = vmatpush.xpose.msra.mxu0 0.0
        %1046 = vmatpush.xpose.msra.mxu0 0.0
        %1047 = vmatpush.xpose.msra.mxu0 0.0
        %1048 = vmatpush.xpose.msra.mxu0 0.0
        %1049 = vmatpush.xpose.msra.mxu0 %v1032
        %1050 = vmatmul.f32.gmra.mxu0 %v1030
        %v1051 = vpop.f32.mrf.mxu0
        %v1052 = vadd.f32 0.0, %v1051
        %1053 = vdwg.mxu0
        %v1054 = vmul.f32 %v1052, 0.35355338
        %v1055 = vadd.f32 %v1054, %v790
        %v1056 = vsel %vm762, %v1055, -inf
        %1057 = vmax.xlane.f32.xlu0 %v1056
        %v1058 = vpop.xlane.xlu0 %1057
        %v1059 = vsub.f32 %v1055, %v1058
        %v1060 = vmul.f32 %v1059, 1.442695
        %v1061 = vpow.pop %v1060
        %v1062 = vsel %vm762, %v1061, 0.0
        %1063 = vadd.xlane.f32.xlu0 %v1062
        %v1064 = vpop.xlane.xlu0 %1063
        %v1065 = vrcp.pop %v1064
        %v1066 = vmul.f32 %v1061, %v1065
        %1067 = vrot.lane.b32.xlu0 %v691, 40
        %v1068 = vpop.permute.xlu0 %1067
        %v1071 = vsel %vm762, %v1066, 0
        %1073 = vmatpush.msra.mxu0 0.0
        %1074 = vmatpush.msra.mxu0 0.0
        %1075 = vmatpush.msra.mxu0 0.0
        %1076 = vmatpush.msra.mxu0 0.0
        %1077 = vmatpush.msra.mxu0 0.0
        %1078 = vmatpush.msra.mxu0 0.0
        %1079 = vmatpush.msra.mxu0 0.0
        %1080 = vmatpush.msra.mxu0 0.0
        %1081 = vmatpush.msra.mxu0 0.0
        %1082 = vmatpush.msra.mxu0 0.0
        %1083 = vmatpush.msra.mxu0 0.0
        %1084 = vmatpush.msra.mxu0 0.0
        %1085 = vmatpush.msra.mxu0 0.0
        %1086 = vmatpush.msra.mxu0 0.0
        %1087 = vmatpush.msra.mxu0 0.0
        %1088 = vmatpush.msra.mxu0 %v1068
        %1089 = vmatmul.f32.gmra.mxu0 %v1071
        %v1090 = vpop.f32.mrf.mxu0
        %v1091 = vadd.f32 0.0, %v1090
        %1092 = vdwg.mxu0
        %v1093 = vpack.c.bf16 %v1091, %v1091
        %v1095 = vsel %vm762, %v1093, 0
        %v1098 = vsel %vm902, %v758, 0
        %1100 = vmatpush.bf16.msra.mxu0 0
        %1101 = vmatpush.bf16.msra.mxu0 0
        %1102 = vmatpush.bf16.msra.mxu0 0
        %1103 = vmatpush.bf16.msra.mxu0 0
        %1104 = vmatpush.bf16.msra.mxu0 0
        %1105 = vmatpush.bf16.msra.mxu0 0
        %1106 = vmatpush.bf16.msra.mxu0 0
        %1107 = vmatpush.bf16.msra.mxu0 %v1098
        %1108 = vmatmul.bf16.gmra.mxu0 %v1095
        %v1109 = vpop.f32.mrf.mxu0
        %v1110 = vadd.f32 0.0, %v1109
        %v1111 = vpop.f32.mrf.mxu0
        %1112 = vdwg.mxu0
        %v1113 = vadd.f32 %v1025, %v1110
        %v1114 = vadd.f32 %v630, %v1113
        %v1115 = vld [vmem:[%s548] sm:$0x1]
        %v1116 = vmul.f32 %v1114, %v1114
        %v1117 = vsel %vm633, %v1116, 0.0
        %1118 = vadd.xlane.f32.xlu0 %v1117
        %v1119 = vpop.xlane.xlu0 %1118
        %v1120 = vmul.f32 %v1119, %v643
        %v1121 = vadd.f32 %v1120, 1e-05
        %v1122 = vrsqrt.pop %v1121
        %v1123 = vmul.f32 %v1122, %v1121
        %v1124 = vmul.f32 %v1123, %v1122
        %v1125 = vmul.f32 0.5, %v1124
        %v1126 = vsub.f32 1.5, %v1125
        %v1127 = vmul.f32 %v1122, %v1126
        %vm1128 = vweird.f32 %v1121
        %vm1129 = vweird.f32 %v1122
        %vm1130 = vmor %vm1128, %vm1129
        %v1131 = vsel %vm1130, %v1122, %v1127
        %v1132 = vmul.f32 %v1114, %v1131
        %v1134 = vperm.slane %v1115, 0
        %v1136 = vmul.f32 %v1132, %v1134
        %v1137 = vld [vmem:[%s563] sm:$0xf]
        %v1138 = vld [vmem:[%s563 + $0x4] sm:$0xf]
        %v1139 = vld [vmem:[%s563 + $0x8] sm:$0xf]
        %v1140 = vld [vmem:[%s563 + $0xc] sm:$0xf]
        %v1141 = vpack.c.bf16 %v1136, %v1136
        %v1146 = vunpack.c.l.b16 %v1137
        %v1147 = vunpack.c.l.b16 %v1138
        %v1148 = vunpack.c.l.b16 %v1139
        %v1149 = vunpack.c.l.b16 %v1140
        %v1150 = vpack.c.b16 %v1147, %v1146
        %v1151 = vpack.c.b16 %v1149, %v1148
        %v1155 = vsel %vm633, %v1141, 0
        %1157 = vmatpush.bf16.msra.mxu0 0
        %1158 = vmatpush.bf16.msra.mxu0 0
        %1159 = vmatpush.bf16.msra.mxu0 0
        %1160 = vmatpush.bf16.msra.mxu0 0
        %1161 = vmatpush.bf16.msra.mxu0 0
        %1162 = vmatpush.bf16.msra.mxu0 0
        %1163 = vmatpush.bf16.msra.mxu0 %v1151
        %1164 = vmatpush.bf16.msra.mxu0 %v1150
        %1165 = vmatmul.bf16.gmra.mxu0 %v1155
        %v1166 = vpop.f32.mrf.mxu0
        %v1167 = vadd.f32 0.0, %v1166
        %v1168 = vpop.f32.mrf.mxu0
        %1169 = vdwg.mxu0
        %v1170 = vxor.u32 %v1167, 2147483648
        %v1171 = vmul.f32 %v1170, 1.442695
        %v1172 = vpow.pop %v1171
        %v1173 = vadd.f32 %v1172, 1.0
        %v1174 = vrcp.pop %v1173
        %v1175 = vmul.f32 %v1173, %v1174
        %v1176 = vsub.f32 1.0, %v1175
        %v1177 = vmul.f32 %v1174, %v1176
        %v1178 = vadd.f32 %v1174, %v1177
        %vm1179 = vweird.f32 %v1173
        %vm1180 = vweird.f32 %v1174
        %vm1181 = vmor %vm1179, %vm1180
        %v1182 = vsel %vm1181, %v1174, %v1178
        %v1183 = vand.u32 2147483647, %v1173
        %vm1184 = vcmp.eq.f32.partialorder %v1183, 8.507059e+37
        %v1185 = vand.u32 %v1173, 2147483648
        %v1186 = vor.u32 1.1754944e-38, %v1185
        %v1187 = vsel %vm1184, %v1186, %v1182
        %v1188 = vmul.f32 1.0, %v1187
        %v1189 = vmul.f32 %v1167, %v1188
        %1191 = vrot.lane.b32.xlu0 %v1167, 64
        %v1192 = vpop.permute.xlu0 %1191
        %v1194 = vmul.f32 %v1189, %v1192
        %v1195 = vld [vmem:[%s568] sm:$0xf]
        %v1196 = vld [vmem:[%s568 + $0x4] sm:$0xf]
        %v1197 = vld [vmem:[%s568 + $0x8] sm:$0xf]
        %v1198 = vld [vmem:[%s568 + $0xc] sm:$0xf]
        %v1199 = vld [vmem:[%s568 + $0x10] sm:$0xf]
        %v1200 = vld [vmem:[%s568 + $0x14] sm:$0xf]
        %v1201 = vld [vmem:[%s568 + $0x18] sm:$0xf]
        %v1202 = vld [vmem:[%s568 + $0x1c] sm:$0xf]
        %v1203 = vpack.c.bf16 %v1194, %v1194
        %v1212 = vunpack.c.l.b16 %v1195
        %v1213 = vunpack.c.l.b16 %v1196
        %v1214 = vunpack.c.l.b16 %v1197
        %v1215 = vunpack.c.l.b16 %v1198
        %v1216 = vunpack.c.l.b16 %v1199
        %v1217 = vunpack.c.l.b16 %v1200
        %v1218 = vunpack.c.l.b16 %v1201
        %v1219 = vunpack.c.l.b16 %v1202
        %v1220 = vpack.c.b16 %v1213, %v1212
        %v1221 = vpack.c.b16 %v1215, %v1214
        %v1222 = vpack.c.b16 %v1217, %v1216
        %v1223 = vpack.c.b16 %v1219, %v1218
        %vm1228 = vcmask 523264
        %v1230 = vsel %vm1228, %v1203, 0
        %1232 = vmatpush.bf16.msra.mxu0 0
        %1233 = vmatpush.bf16.msra.mxu0 0
        %1234 = vmatpush.bf16.msra.mxu0 0
        %1235 = vmatpush.bf16.msra.mxu0 0
        %1236 = vmatpush.bf16.msra.mxu0 %v1223
        %1237 = vmatpush.bf16.msra.mxu0 %v1222
        %1238 = vmatpush.bf16.msra.mxu0 %v1221
        %1239 = vmatpush.bf16.msra.mxu0 %v1220
        %1240 = vmatmul.bf16.gmra.mxu0 %v1230
        %v1241 = vpop.f32.mrf.mxu0
        %v1242 = vadd.f32 0.0, %v1241
        %v1243 = vpop.f32.mrf.mxu0
        %1244 = vdwg.mxu0
        %v1245 = vadd.f32 %v1114, %v1242
        %1246 = vst.msk [vmem:[#allocation2] sm:$0xff] %vm633, %v1245
        %p1247 = scmp.eq.s32.totalorder %s32, 1
        // Predicated region
        $region77: #{encoding_model_forward.1} parent=71 // pred_check
          %p1248 = pneg %p1247
        $region78: #{encoding_model_forward.1} parent=71 // pred_check_branch
          %1250 = sbr.rel (%p1248) target = $region80
        $region79: #{encoding_model_forward.1} parent=71 // pred_region
          %v1251 = vld [vmem:[%s6] sm:$0x1]
          %v1252 = vmul.f32 %v1245, %v1245
          %v1253 = vsel %vm633, %v1252, 0.0
          %1254 = vadd.xlane.f32.xlu0 %v1253
          %v1255 = vpop.xlane.xlu0 %1254
          %v1256 = vmul.f32 %v1255, %v643
          %v1257 = vadd.f32 %v1256, 1e-05
          %v1258 = vrsqrt.pop %v1257
          %v1259 = vmul.f32 %v1258, %v1257
          %v1260 = vmul.f32 %v1259, %v1258
          %v1261 = vmul.f32 0.5, %v1260
          %v1262 = vsub.f32 1.5, %v1261
          %v1263 = vmul.f32 %v1258, %v1262
          %vm1264 = vweird.f32 %v1257
          %vm1265 = vweird.f32 %v1258
          %vm1266 = vmor %vm1264, %vm1265
          %v1267 = vsel %vm1266, %v1258, %v1263
          %v1268 = vmul.f32 %v1245, %v1267
          %v1270 = vperm.slane %v1251, 0
          %v1272 = vmul.f32 %v1268, %v1270
          %v1274 = vsel %vm762, %v621, 0
          %1276 = vmatpush.msra.mxu0 0.0
          %1277 = vmatpush.msra.mxu0 0.0
          %1278 = vmatpush.msra.mxu0 0.0
          %1279 = vmatpush.msra.mxu0 0.0
          %1280 = vmatpush.msra.mxu0 0.0
          %1281 = vmatpush.msra.mxu0 0.0
          %1282 = vmatpush.msra.mxu0 0.0
          %1283 = vmatpush.msra.mxu0 0.0
          %1284 = vmatpush.msra.mxu0 0.0
          %1285 = vmatpush.msra.mxu0 0.0
          %1286 = vmatpush.msra.mxu0 0.0
          %1287 = vmatpush.msra.mxu0 0.0
          %1288 = vmatpush.msra.mxu0 0.0
          %1289 = vmatpush.msra.mxu0 0.0
          %1290 = vmatpush.msra.mxu0 0.0
          %1291 = vmatpush.msra.mxu0 %v1272
          %1292 = vmatmul.f32.gmra.mxu0 %v1274
          %v1293 = vpop.f32.mrf.mxu0
          %v1294 = vadd.f32 0.0, %v1293
          %1295 = vdwg.mxu0
          %vm1296 = vcmask 57344
          %v1297 = vsel %vm1296, %v621, 0.0
          %1298 = vadd.xlane.f32.xlu0 %v1297
          %v1299 = vpop.xlane.xlu0 %1298
          %v1300 = vmax.f32 %v1299, 1.0
          %v1301 = vrcp.pop %v1300
          %v1302 = vmul.f32 %v1294, %v1301
          %vm1303 = vcmask 253952
          %1304 = vst.msk [vmem:[%s535] sm:$0x1] %vm1303, %v1302
        $region80: #{encoding_model_forward.1} parent=71 // pred_fallthru
          _
        %s1305 = sand.u32 %s360, 1
        %s1306 = scalar_lea.sflag [#allocation4], %s1305
        %s1307 = sand.u32 %s360, 1
        %s1308 = scalar_lea.vmem [#allocation3], %s1307
        // Predicated region
        $region81: #{encoding_model_forward.1} parent=71 // pred_check
          %p1309 = pneg %p370
        $region82: #{encoding_model_forward.1} parent=71 // pred_check_branch
          %1311 = sbr.rel (%p1309) target = $region84
        $region83: #{encoding_model_forward.1} parent=71 // pred_region
          %1313 = vsyncadd %s1306, 0
          %s1314 = scalar_lea.hbm %s13, %s31
          %s1316 = sshll.u32 %s1308, 4
          %s1317 = int_to_ptr.vmem [resolvable:$true] %s1316
          %s1318 = sshll.u32 %s1314, 4
          %s1319 = int_to_ptr.hbm [resolvable:$true] %s1318
          %1321 = dma.vmem_to_hbm [thread:$0]  %s1317, 16, %s1319, %s1306
        $region84: #{encoding_model_forward.1} parent=71 // pred_fallthru
          _
      $region72: #{encoding_model_forward.1} parent=5 // pred_fallthru
        _
      %p1322 = scmp.le.s32.totalorder 2, %s22
      // Predicated region
      $region85: #{encoding_model_forward.1} parent=5 // pred_check
        %p1323 = pneg %p1322
      $region86: #{encoding_model_forward.1} parent=5 // pred_check_branch
        %1325 = sbr.rel (%p1323) target = $region88
      $region87: #{encoding_model_forward.1} parent=5 // pred_region
        %s1326 = ssub.s32 %s22, 2
        // Predicated region
        $region89: #{encoding_model_forward.1} parent=87 // pred_check
          %p1327 = pneg %p376
        $region90: #{encoding_model_forward.1} parent=87 // pred_check_branch
          %1329 = sbr.rel (%p1327) target = $region92
        $region91: #{encoding_model_forward.1} parent=87 // pred_region
          %s1330 = sand.u32 %s361, 1
          %s1331 = scalar_lea.sflag [#allocation4], %s1330
          %s1332 = sand.u32 %s361, 1
          %s1333 = scalar_lea.vmem [#allocation3], %s1332
          %1335 = dma.done %s1331, 16
        $region92: #{encoding_model_forward.1} parent=87 // pred_fallthru
          _
      $region88: #{encoding_model_forward.1} parent=5 // pred_fallthru
        _
    $region6: #{encoding_model_forward.1} parent=1 // loop_footer
      %s26 = sadd.s32 1, %s22
    $region7: #{encoding_model_forward.1} parent=1 // loop_footer_branch
      %21 = sbr.rel target = $region3
    $region8: #{encoding_model_forward.1} parent=1 // loop_exit
      _
    %1336 = vsyncpa [#allocation4], 1
    %s1337 = scalar_lea.sflag [#allocation4], 1
    %1338 = vsyncpa %s1337, 1

</llo_original>
